<compile_context>
chip_gen: v6e
topology: v6e:2x2x1
jax: 0.10.0
libtpu: 0.0.40
codegen_flags: <defaults>
</compile_context>

<pallas_src>
import functools

import jax
import jax.numpy as jnp
from jax.experimental import pallas as pl
from jax.experimental.pallas import tpu as pltpu


_VMEM = pl.BlockSpec(memory_space=pltpu.MemorySpace.VMEM)
_NEG_INF = -1e30  # fp32 "no edge" sentinel; exp underflows to exactly 0


# ----------------------------- Pallas kernels -------------------------------

def _linear_kernel(x_ref, w_ref, b_ref, o_ref, *, activation):
    y = jnp.dot(x_ref[...], w_ref[...], preferred_element_type=jnp.float32)
    y = y + b_ref[...]
    if activation == "relu":
        y = jnp.maximum(y, 0.0)
    elif activation == "sigmoid":
        y = 1.0 / (1.0 + jnp.exp(-y))
    o_ref[...] = y.astype(o_ref.dtype)


def pallas_linear(x, w, b, activation="none"):
    """y = act(x @ w + b). Small full-array VMEM blocks, single grid step."""
    n = x.shape[0]
    dout = w.shape[1]
    return pl.pallas_call(
        functools.partial(_linear_kernel, activation=activation),
        out_shape=jax.ShapeDtypeStruct((n, dout), jnp.float32),
        in_specs=[_VMEM, _VMEM, _VMEM],
        out_specs=_VMEM,
    )(x.astype(jnp.float32), w.astype(jnp.float32),
      b.reshape(1, dout).astype(jnp.float32))


def _mlp2_kernel(x_ref, w1_ref, b1_ref, w2_ref, b2_ref, o_ref, *, out_act):
    h = jnp.dot(x_ref[...], w1_ref[...], preferred_element_type=jnp.float32)
    h = jnp.maximum(h + b1_ref[...], 0.0)
    y = jnp.dot(h, w2_ref[...], preferred_element_type=jnp.float32)
    y = y + b2_ref[...]
    if out_act == "sigmoid":
        y = 1.0 / (1.0 + jnp.exp(-y))
    o_ref[...] = y.astype(o_ref.dtype)


def pallas_mlp2(x, w1, b1, w2, b2, out_act="none"):
    """Fused Linear -> ReLU -> Linear (-> optional sigmoid) in one kernel."""
    n = x.shape[0]
    d1 = w1.shape[1]
    d2 = w2.shape[1]
    return pl.pallas_call(
        functools.partial(_mlp2_kernel, out_act=out_act),
        out_shape=jax.ShapeDtypeStruct((n, d2), jnp.float32),
        in_specs=[_VMEM] * 5,
        out_specs=_VMEM,
    )(x.astype(jnp.float32), w1.astype(jnp.float32),
      b1.reshape(1, d1).astype(jnp.float32),
      w2.astype(jnp.float32), b2.reshape(1, d2).astype(jnp.float32))


def _gat_kernel(logits_ref, xpm_ref, bias_ref, o_ref, *, heads):
    # logits_ref: [H, tNd, Ns] fp32 pre-softmax logits (-1e30 where no edge)
    # xpm_ref:    [H, Ns, H*C] bf16 head-spread (block-diagonal) features
    # bias_ref:   [1, H*C]     fp32 output bias (PyG concat order)
    # o_ref:      [tNd, H*C]   fp32 lane-dense output slab
    l = logits_ref[...]                               # softmax math in fp32
    m = jnp.max(l, axis=-1, keepdims=True)            # finite: self-loop exists
    p = jnp.exp(l - m)                                # masked entries -> 0
    denom = jnp.sum(p, axis=-1, keepdims=True)        # > 0
    attn = (p * pl.reciprocal(denom, approx=True)).astype(jnp.bfloat16)

    out = bias_ref[...]                               # [1, H*C] -> broadcast
    for hh in range(heads):                           # static unroll over heads
        out = out + jnp.dot(attn[hh], xpm_ref[hh],
                            preferred_element_type=jnp.float32)
    o_ref[...] = jnp.maximum(out, 0.0).astype(o_ref.dtype)   # fused F.relu


def _pick_block_rows(n, cap=256):
    """Largest multiple-of-8 divisor of n (<= cap); falls back to n."""
    best = n
    t = 8
    while t <= min(n, cap):
        if n % t == 0:
            best = t
        t += 8
    return best


def pallas_gat_layer(logits, xp, bias, *, block_rows=None):
    heads, n, _ = logits.shape
    hc = xp.shape[1]
    csize = hc // heads

    # Spread each head's C feature columns into its slot of the H*C output
    # width (block-diagonal formulation): every per-head MXU matmul then
    # accumulates into a fully lane-dense [tNd, H*C] tile, and the output is
    # written as one lane-dense slab (no in-kernel transpose / concat).
    xp3 = xp.reshape(n, heads, csize)
    eye = jnp.eye(heads, dtype=jnp.float32)
    xpm = jnp.einsum("nhc,hg->hngc", xp3, eye).reshape(heads, n, hc)
    xpm = xpm.astype(jnp.bfloat16)                    # bf16 matmul operand

    if block_rows is None:
        block_rows = _pick_block_rows(n)
    assert n % block_rows == 0, (n, block_rows)
    grid = (n // block_rows,)

    return pl.pallas_call(
        functools.partial(_gat_kernel, heads=heads),
        out_shape=jax.ShapeDtypeStruct((n, hc), jnp.float32),
        grid_spec=pltpu.PrefetchScalarGridSpec(
            num_scalar_prefetch=0,
            grid=grid,
            in_specs=[
                pl.BlockSpec((heads, block_rows, n), lambda i: (0, i, 0)),
                pl.BlockSpec((heads, n, hc), lambda i: (0, 0, 0)),
                pl.BlockSpec((1, hc), lambda i: (0, 0)),
            ],
            out_specs=pl.BlockSpec((block_rows, hc), lambda i: (i, 0)),
        ),
        compiler_params=pltpu.CompilerParams(
            dimension_semantics=("parallel",),        # v7x: shard rows on 2 TCs
            vmem_limit_bytes=48 * 1024 * 1024,        # < 64 MiB physical (v7x)
        ),
    )(logits.astype(jnp.float32), xpm, bias.astype(jnp.float32))


# ----------------------------- Model (glue) ---------------------------------

def init_params(key, node_dim, edge_dim, temporal_dim, hidden, heads, layers):
    c = hidden // heads
    keys = iter(jax.random.split(key, 64))
    nrm = lambda shape, s=0.1: s * jax.random.normal(next(keys), shape,
                                                     dtype=jnp.float32)
    p = {
        "node_proj_w": nrm((node_dim, hidden)), "node_proj_b": nrm((hidden,)),
        "edge_proj_w": nrm((edge_dim, hidden)), "edge_proj_b": nrm((hidden,)),
        "gat": [],
        "mal_w1": nrm((hidden, hidden // 2)), "mal_b1": nrm((hidden // 2,)),
        "mal_w2": nrm((hidden // 2, 1)), "mal_b2": nrm((1,)),
        "tp_w1": nrm((hidden + temporal_dim, hidden)), "tp_b1": nrm((hidden,)),
        "tp_w2": nrm((hidden, temporal_dim)), "tp_b2": nrm((temporal_dim,)),
    }
    for _ in range(layers):
        p["gat"].append({
            "lin_w": nrm((hidden, heads * c)),          # shared src/dst, no bias
            "lin_edge_w": nrm((hidden, heads * c)),     # no bias
            "att_src": nrm((heads, c)),
            "att_dst": nrm((heads, c)),
            "att_edge": nrm((heads, c)),
            "bias": nrm((heads * c,)),
        })
    return p


def magnn_forward(params, x, edge_index, edge_attr, temporal,
                  hidden, heads, gat_block_rows=None):
    n = x.shape[0]
    c = hidden // heads
    src = edge_index[0]
    dst = edge_index[1]

    # GraphEncoder input projections
    h = pallas_linear(x, params["node_proj_w"], params["node_proj_b"])
    ea = pallas_linear(edge_attr, params["edge_proj_w"], params["edge_proj_b"])

    diag = jnp.arange(n)
    deg = jnp.zeros((n,), jnp.float32).at[dst].add(1.0)

    for lp in params["gat"]:
        lin_w = lp["lin_w"]                                    # [hidden, H*C]
        lw3 = lin_w.reshape(hidden, heads, c)
        m_src = (lw3 * lp["att_src"][None]).sum(-1)            # [hidden, H]
        m_dst = (lw3 * lp["att_dst"][None]).sum(-1)            # [hidden, H]
        m_edge = (lp["lin_edge_w"].reshape(hidden, heads, c)
                  * lp["att_edge"][None]).sum(-1)              # [hidden, H]

        # One fused projection: [xp | a_src | a_dst] (PyG lin has no bias);
        # a_src/a_dst come out of the same MXU matmul as xp.
        w_cat = jnp.concatenate([lin_w, m_src, m_dst], axis=1)
        proj = pallas_linear(h, w_cat,
                             jnp.zeros((heads * c + 2 * heads,), jnp.float32))
        xp = proj[:, :heads * c]                               # [N, H*C]
        a_src = proj[:, heads * c:heads * c + heads]           # [N, H]
        a_dst = proj[:, heads * c + heads:]                    # [N, H]

        # per-edge attention logit from edge attrs (lin_edge folded w/ att_edge)
        alpha_e = pallas_linear(ea, m_edge,
                                jnp.zeros((heads,), jnp.float32))   # [E, H]

        # self-loop edge attr = mean of incoming edge attrs (fill_value='mean');
        # lin_edge is bias-free so the mean commutes with the projection.
        sums = jnp.zeros((n, heads), jnp.float32).at[dst].add(alpha_e)
        loop_alpha = sums / jnp.maximum(deg, 1.0)[:, None]     # [N, H]

        lrelu = lambda v: jnp.where(v > 0, v, 0.2 * v)         # slope 0.2
        logit_e = lrelu(a_dst[dst] + a_src[src] + alpha_e)     # [E, H]
        logit_loop = lrelu(a_dst + a_src + loop_alpha)         # [N, H]

        # Dense pre-softmax logits, head-major [H, Nd, Ns], mask folded in as
        # a -1e30 fill (exp underflows to 0 inside the kernel).
        # NOTE: duplicate (dst, src) edges or explicit self loops in the input
        # would be overwritten (not softmaxed as separate edge instances).
        logits = jnp.full((heads, n, n), _NEG_INF, jnp.float32)
        logits = logits.at[:, dst, src].set(logit_e.T)
        logits = logits.at[:, diag, diag].set(logit_loop.T)

        h = pallas_gat_layer(logits, xp, lp["bias"].reshape(1, heads * c),
                             block_rows=gat_block_rows)        # [N, H*C]

    # fused malicious_score head: Linear -> ReLU -> Linear -> Sigmoid
    malicious_scores = pallas_mlp2(h, params["mal_w1"], params["mal_b1"],
                                   params["mal_w2"], params["mal_b2"],
                                   out_act="sigmoid")          # [N, 1]

    # fused temporal_predictor head: Linear -> ReLU -> Linear
    tp_in = jnp.concatenate([h, temporal], axis=1)
    temporal_pred = pallas_mlp2(tp_in, params["tp_w1"], params["tp_b1"],
                                params["tp_w2"], params["tp_b2"])

    # TODO(synk): TemporalNodeContrast / EdgeLevelContrast /
    # MultiHeadHierarchicalContrast are undefined in the reference and only
    # run when aug_data is provided; only the aug_data=None path is implemented.
    return malicious_scores, temporal_pred


# --------------------------------- demo -------------------------------------

if __name__ == "__main__":
    NODE_DIM, EDGE_DIM, TEMPORAL_DIM = 8, 6, 4
    HIDDEN, HEADS, LAYERS = 32, 4, 3
    N = 16

    key = jax.random.PRNGKey(0)
    k_param, k_x, k_e, k_t = jax.random.split(key, 4)

    params = init_params(k_param, NODE_DIM, EDGE_DIM, TEMPORAL_DIM,
                         HIDDEN, HEADS, LAYERS)

    x = jax.random.normal(k_x, (N, NODE_DIM), dtype=jnp.float32)
    temporal = jax.random.normal(k_t, (N, TEMPORAL_DIM), dtype=jnp.float32)

    # simple ring + skip graph: no duplicate edges, no self loops, E = 2N
    src = jnp.concatenate([jnp.arange(N), jnp.arange(N)])
    dst = jnp.concatenate([(jnp.arange(N) + 1) % N, (jnp.arange(N) + 2) % N])
    edge_index = jnp.stack([src, dst]).astype(jnp.int32)          # [2, 32]
    E = edge_index.shape[1]
    edge_attr = jax.random.normal(k_e, (E, EDGE_DIM), dtype=jnp.float32)

    # block_rows=8 -> grid of 2 destination-row tiles (exercises the pipeline)
    fwd = jax.jit(functools.partial(magnn_forward, hidden=HIDDEN, heads=HEADS,
                                    gat_block_rows=8))
    malicious_scores, temporal_pred = fwd(params, x, edge_index, edge_attr,
                                          temporal)
    jax.block_until_ready((malicious_scores, temporal_pred))

    assert malicious_scores.shape == (N, 1)
    assert temporal_pred.shape == (N, TEMPORAL_DIM)
    assert bool(jnp.all(jnp.isfinite(malicious_scores)))
    assert bool(jnp.all(jnp.isfinite(temporal_pred)))
    assert bool(jnp.all((malicious_scores >= 0) & (malicious_scores <= 1)))
    print("KERNEL_OK")
</pallas_src>

<mosaic_0001>
module attributes {stable_mosaic.version = 11 : i64} {
  func.func private @main(%arg0: i32) attributes {dimension_semantics = [#tpu.dimension_semantics<core_parallel>], iteration_bounds = array<i64: 2>, tpu.core_type = #tpu.core_type<sc_scalar_subcore>, window_params = []} {
    return
  }
}

module attributes {stable_mosaic.version = 11 : i64} {
  func.func private @main(%arg0: i32) attributes {dimension_semantics = [#tpu.dimension_semantics<core_parallel>], iteration_bounds = array<i64: 2>, tpu.core_type = #tpu.core_type<sc_scalar_subcore>, window_params = []} {
    return
  }
}

module attributes {stable_mosaic.version = 11 : i64} {
  func.func @_linear_kernel(%arg0: memref<32x6xf32, #tpu.memory_space<vmem>>, %arg1: memref<6x32xf32, #tpu.memory_space<vmem>>, %arg2: memref<1x32xf32, #tpu.memory_space<vmem>>, %arg3: memref<32x32xf32, #tpu.memory_space<vmem>>) attributes {dimension_semantics = [], scalar_prefetch = 0 : i64, scratch_operands = 0 : i64, tpu.core_type = #tpu.core_type<tc>} {
    %c0 = arith.constant 0 : index
    %c0_0 = arith.constant 0 : index
    %0 = vector.load %arg0[%c0, %c0_0] : memref<32x6xf32, #tpu.memory_space<vmem>>, vector<32x6xf32>
    %c0_1 = arith.constant 0 : index
    %c0_2 = arith.constant 0 : index
    %1 = vector.load %arg1[%c0_1, %c0_2] : memref<6x32xf32, #tpu.memory_space<vmem>>, vector<6x32xf32>
    %cst = arith.constant dense<0.000000e+00> : vector<32x32xf32>
    %2 = tpu.matmul %0, %1, %cst {dimension_numbers = #tpu.dot_dimension_numbers<[1], [0], [0], [1], [0, 0, 1, 1], [], []>} : vector<32x6xf32>, vector<6x32xf32>, vector<32x32xf32> -> vector<32x32xf32>
    %c0_3 = arith.constant 0 : index
    %c0_4 = arith.constant 0 : index
    %3 = vector.load %arg2[%c0_3, %c0_4] : memref<1x32xf32, #tpu.memory_space<vmem>>, vector<1x32xf32>
    %4 = vector.broadcast %3 : vector<1x32xf32> to vector<32x32xf32>
    %5 = arith.addf %2, %4 : vector<32x32xf32>
    %c0_5 = arith.constant 0 : index
    %c0_6 = arith.constant 0 : index
    %6 = vector.load %arg3[%c0_5, %c0_6] : memref<32x32xf32, #tpu.memory_space<vmem>>, vector<32x32xf32>
    tpu.vector_store %arg3[%c0_5, %c0_6], %5 {strides = array<i32>} : memref<32x32xf32, #tpu.memory_space<vmem>>, vector<32x32xf32>,
    return
  }
}

module attributes {stable_mosaic.version = 11 : i64} {
  func.func @_linear_kernel(%arg0: memref<32x32xf32, #tpu.memory_space<vmem>>, %arg1: memref<32x4xf32, #tpu.memory_space<vmem>>, %arg2: memref<1x4xf32, #tpu.memory_space<vmem>>, %arg3: memref<32x4xf32, #tpu.memory_space<vmem>>) attributes {dimension_semantics = [], scalar_prefetch = 0 : i64, scratch_operands = 0 : i64, tpu.core_type = #tpu.core_type<tc>} {
    %c0 = arith.constant 0 : index
    %c0_0 = arith.constant 0 : index
    %0 = vector.load %arg0[%c0, %c0_0] : memref<32x32xf32, #tpu.memory_space<vmem>>, vector<32x32xf32>
    %c0_1 = arith.constant 0 : index
    %c0_2 = arith.constant 0 : index
    %1 = vector.load %arg1[%c0_1, %c0_2] : memref<32x4xf32, #tpu.memory_space<vmem>>, vector<32x4xf32>
    %cst = arith.constant dense<0.000000e+00> : vector<32x4xf32>
    %2 = tpu.matmul %0, %1, %cst {dimension_numbers = #tpu.dot_dimension_numbers<[1], [0], [0], [1], [0, 0, 1, 1], [], []>} : vector<32x32xf32>, vector<32x4xf32>, vector<32x4xf32> -> vector<32x4xf32>
    %c0_3 = arith.constant 0 : index
    %c0_4 = arith.constant 0 : index
    %3 = vector.load %arg2[%c0_3, %c0_4] : memref<1x4xf32, #tpu.memory_space<vmem>>, vector<1x4xf32>
    %4 = vector.broadcast %3 : vector<1x4xf32> to vector<32x4xf32>
    %5 = arith.addf %2, %4 : vector<32x4xf32>
    %c0_5 = arith.constant 0 : index
    %c0_6 = arith.constant 0 : index
    %6 = vector.load %arg3[%c0_5, %c0_6] : memref<32x4xf32, #tpu.memory_space<vmem>>, vector<32x4xf32>
    tpu.vector_store %arg3[%c0_5, %c0_6], %5 {strides = array<i32>} : memref<32x4xf32, #tpu.memory_space<vmem>>, vector<32x4xf32>,
    return
  }
}

module attributes {stable_mosaic.version = 11 : i64} {
  func.func @_linear_kernel(%arg0: memref<16x8xf32, #tpu.memory_space<vmem>>, %arg1: memref<8x32xf32, #tpu.memory_space<vmem>>, %arg2: memref<1x32xf32, #tpu.memory_space<vmem>>, %arg3: memref<16x32xf32, #tpu.memory_space<vmem>>) attributes {dimension_semantics = [], scalar_prefetch = 0 : i64, scratch_operands = 0 : i64, tpu.core_type = #tpu.core_type<tc>} {
    %c0 = arith.constant 0 : index
    %c0_0 = arith.constant 0 : index
    %0 = vector.load %arg0[%c0, %c0_0] : memref<16x8xf32, #tpu.memory_space<vmem>>, vector<16x8xf32>
    %c0_1 = arith.constant 0 : index
    %c0_2 = arith.constant 0 : index
    %1 = vector.load %arg1[%c0_1, %c0_2] : memref<8x32xf32, #tpu.memory_space<vmem>>, vector<8x32xf32>
    %cst = arith.constant dense<0.000000e+00> : vector<16x32xf32>
    %2 = tpu.matmul %0, %1, %cst {dimension_numbers = #tpu.dot_dimension_numbers<[1], [0], [0], [1], [0, 0, 1, 1], [], []>} : vector<16x8xf32>, vector<8x32xf32>, vector<16x32xf32> -> vector<16x32xf32>
    %c0_3 = arith.constant 0 : index
    %c0_4 = arith.constant 0 : index
    %3 = vector.load %arg2[%c0_3, %c0_4] : memref<1x32xf32, #tpu.memory_space<vmem>>, vector<1x32xf32>
    %4 = vector.broadcast %3 : vector<1x32xf32> to vector<16x32xf32>
    %5 = arith.addf %2, %4 : vector<16x32xf32>
    %c0_5 = arith.constant 0 : index
    %c0_6 = arith.constant 0 : index
    %6 = vector.load %arg3[%c0_5, %c0_6] : memref<16x32xf32, #tpu.memory_space<vmem>>, vector<16x32xf32>
    tpu.vector_store %arg3[%c0_5, %c0_6], %5 {strides = array<i32>} : memref<16x32xf32, #tpu.memory_space<vmem>>, vector<16x32xf32>,
    return
  }
}

module attributes {stable_mosaic.version = 11 : i64} {
  func.func @_linear_kernel(%arg0: memref<16x32xf32, #tpu.memory_space<vmem>>, %arg1: memref<32x40xf32, #tpu.memory_space<vmem>>, %arg2: memref<1x40xf32, #tpu.memory_space<vmem>>, %arg3: memref<16x40xf32, #tpu.memory_space<vmem>>) attributes {dimension_semantics = [], scalar_prefetch = 0 : i64, scratch_operands = 0 : i64, tpu.core_type = #tpu.core_type<tc>} {
    %c0 = arith.constant 0 : index
    %c0_0 = arith.constant 0 : index
    %0 = vector.load %arg0[%c0, %c0_0] : memref<16x32xf32, #tpu.memory_space<vmem>>, vector<16x32xf32>
    %c0_1 = arith.constant 0 : index
    %c0_2 = arith.constant 0 : index
    %1 = vector.load %arg1[%c0_1, %c0_2] : memref<32x40xf32, #tpu.memory_space<vmem>>, vector<32x40xf32>
    %cst = arith.constant dense<0.000000e+00> : vector<16x40xf32>
    %2 = tpu.matmul %0, %1, %cst {dimension_numbers = #tpu.dot_dimension_numbers<[1], [0], [0], [1], [0, 0, 1, 1], [], []>} : vector<16x32xf32>, vector<32x40xf32>, vector<16x40xf32> -> vector<16x40xf32>
    %c0_3 = arith.constant 0 : index
    %c0_4 = arith.constant 0 : index
    %3 = vector.load %arg2[%c0_3, %c0_4] : memref<1x40xf32, #tpu.memory_space<vmem>>, vector<1x40xf32>
    %4 = vector.broadcast %3 : vector<1x40xf32> to vector<16x40xf32>
    %5 = arith.addf %2, %4 : vector<16x40xf32>
    %c0_5 = arith.constant 0 : index
    %c0_6 = arith.constant 0 : index
    %6 = vector.load %arg3[%c0_5, %c0_6] : memref<16x40xf32, #tpu.memory_space<vmem>>, vector<16x40xf32>
    tpu.vector_store %arg3[%c0_5, %c0_6], %5 {strides = array<i32>} : memref<16x40xf32, #tpu.memory_space<vmem>>, vector<16x40xf32>,
    return
  }
}

module attributes {stable_mosaic.version = 11 : i64} {
  func.func @_gat_kernel(%arg0: i32, %arg1: memref<4x8x16xf32, #tpu.memory_space<vmem>>, %arg2: memref<4x16x32xbf16, #tpu.memory_space<vmem>>, %arg3: memref<1x32xf32, #tpu.memory_space<vmem>>, %arg4: memref<8x32xf32, #tpu.memory_space<vmem>>) attributes {dimension_semantics = [#tpu.dimension_semantics<parallel>], iteration_bounds = array<i64: 2>, scalar_prefetch = 0 : i64, scratch_operands = 0 : i64, tpu.core_type = #tpu.core_type<tc>, window_params = [{transform_indices = @transform_0, window_bounds = array<i64: 4, 8, 16>}, {pipeline_mode = #tpu.pipeline_mode<synchronous>, transform_indices = @transform_1, window_bounds = array<i64: 4, 16, 32>}, {pipeline_mode = #tpu.pipeline_mode<synchronous>, transform_indices = @transform_2, window_bounds = array<i64: 1, 32>}, {transform_indices = @transform_3, window_bounds = array<i64: 8, 32>}]} {
    %c0 = arith.constant 0 : index
    %c0_0 = arith.constant 0 : index
    %c0_1 = arith.constant 0 : index
    %0 = vector.load %arg1[%c0, %c0_0, %c0_1] : memref<4x8x16xf32, #tpu.memory_space<vmem>>, vector<4x8x16xf32>
    %cst = arith.constant dense<0xFF800000> : vector<4x8xf32>
    %1 = vector.multi_reduction <maximumf>, %0, %cst [2] : vector<4x8x16xf32> to vector<4x8xf32>
    %2 = vector.shape_cast %1 : vector<4x8xf32> to vector<4x8x1xf32>
    %3 = vector.broadcast %2 : vector<4x8x1xf32> to vector<4x8x16xf32>
    %4 = arith.subf %0, %3 : vector<4x8x16xf32>
    %5 = math.exp %4 : vector<4x8x16xf32>
    %cst_2 = arith.constant dense<0.000000e+00> : vector<4x8xf32>
    %6 = vector.multi_reduction <add>, %5, %cst_2 [2] : vector<4x8x16xf32> to vector<4x8xf32>
    %7 = vector.shape_cast %6 : vector<4x8xf32> to vector<4x8x1xf32>
    %8 = tpu.reciprocal %7 {approx = true} : vector<4x8x1xf32> -> vector<4x8x1xf32>
    %9 = vector.broadcast %8 : vector<4x8x1xf32> to vector<4x8x16xf32>
    %10 = arith.mulf %5, %9 : vector<4x8x16xf32>
    %11 = arith.truncf %10 : vector<4x8x16xf32> to vector<4x8x16xbf16>
    %c0_3 = arith.constant 0 : index
    %c0_4 = arith.constant 0 : index
    %12 = vector.load %arg3[%c0_3, %c0_4] : memref<1x32xf32, #tpu.memory_space<vmem>>, vector<1x32xf32>
    %13 = vector.extract_strided_slice %11 {offsets = [0, 0, 0], sizes = [1, 8, 16], strides = [1, 1, 1]} : vector<4x8x16xbf16> to vector<1x8x16xbf16>
    %14 = vector.shape_cast %13 : vector<1x8x16xbf16> to vector<8x16xbf16>
    %c0_5 = arith.constant 0 : index
    %c0_6 = arith.constant 0 : index
    %c0_7 = arith.constant 0 : index
    %15 = vector.load %arg2[%c0_5, %c0_6, %c0_7] : memref<4x16x32xbf16, #tpu.memory_space<vmem>>, vector<1x16x32xbf16>
    %16 = vector.shape_cast %15 : vector<1x16x32xbf16> to vector<16x32xbf16>
    %cst_8 = arith.constant dense<0.000000e+00> : vector<8x32xf32>
    %17 = tpu.matmul %14, %16, %cst_8 {dimension_numbers = #tpu.dot_dimension_numbers<[1], [0], [0], [1], [0, 0, 1, 1], [], []>} : vector<8x16xbf16>, vector<16x32xbf16>, vector<8x32xf32> -> vector<8x32xf32>
    %18 = vector.broadcast %12 : vector<1x32xf32> to vector<8x32xf32>
    %19 = arith.addf %18, %17 : vector<8x32xf32>
    %20 = vector.extract_strided_slice %11 {offsets = [1, 0, 0], sizes = [1, 8, 16], strides = [1, 1, 1]} : vector<4x8x16xbf16> to vector<1x8x16xbf16>
    %21 = vector.shape_cast %20 : vector<1x8x16xbf16> to vector<8x16xbf16>
    %c1 = arith.constant 1 : index
    %c0_9 = arith.constant 0 : index
    %c0_10 = arith.constant 0 : index
    %22 = vector.load %arg2[%c1, %c0_9, %c0_10] : memref<4x16x32xbf16, #tpu.memory_space<vmem>>, vector<1x16x32xbf16>
    %23 = vector.shape_cast %22 : vector<1x16x32xbf16> to vector<16x32xbf16>
    %cst_11 = arith.constant dense<0.000000e+00> : vector<8x32xf32>
    %24 = tpu.matmul %21, %23, %cst_11 {dimension_numbers = #tpu.dot_dimension_numbers<[1], [0], [0], [1], [0, 0, 1, 1], [], []>} : vector<8x16xbf16>, vector<16x32xbf16>, vector<8x32xf32> -> vector<8x32xf32>
    %25 = arith.addf %19, %24 : vector<8x32xf32>
    %26 = vector.extract_strided_slice %11 {offsets = [2, 0, 0], sizes = [1, 8, 16], strides = [1, 1, 1]} : vector<4x8x16xbf16> to vector<1x8x16xbf16>
    %27 = vector.shape_cast %26 : vector<1x8x16xbf16> to vector<8x16xbf16>
    %c2 = arith.constant 2 : index
    %c0_12 = arith.constant 0 : index
    %c0_13 = arith.constant 0 : index
    %28 = vector.load %arg2[%c2, %c0_12, %c0_13] : memref<4x16x32xbf16, #tpu.memory_space<vmem>>, vector<1x16x32xbf16>
    %29 = vector.shape_cast %28 : vector<1x16x32xbf16> to vector<16x32xbf16>
    %cst_14 = arith.constant dense<0.000000e+00> : vector<8x32xf32>
    %30 = tpu.matmul %27, %29, %cst_14 {dimension_numbers = #tpu.dot_dimension_numbers<[1], [0], [0], [1], [0, 0, 1, 1], [], []>} : vector<8x16xbf16>, vector<16x32xbf16>, vector<8x32xf32> -> vector<8x32xf32>
    %31 = arith.addf %25, %30 : vector<8x32xf32>
    %32 = vector.extract_strided_slice %11 {offsets = [3, 0, 0], sizes = [1, 8, 16], strides = [1, 1, 1]} : vector<4x8x16xbf16> to vector<1x8x16xbf16>
    %33 = vector.shape_cast %32 : vector<1x8x16xbf16> to vector<8x16xbf16>
    %c3 = arith.constant 3 : index
    %c0_15 = arith.constant 0 : index
    %c0_16 = arith.constant 0 : index
    %34 = vector.load %arg2[%c3, %c0_15, %c0_16] : memref<4x16x32xbf16, #tpu.memory_space<vmem>>, vector<1x16x32xbf16>
    %35 = vector.shape_cast %34 : vector<1x16x32xbf16> to vector<16x32xbf16>
    %cst_17 = arith.constant dense<0.000000e+00> : vector<8x32xf32>
    %36 = tpu.matmul %33, %35, %cst_17 {dimension_numbers = #tpu.dot_dimension_numbers<[1], [0], [0], [1], [0, 0, 1, 1], [], []>} : vector<8x16xbf16>, vector<16x32xbf16>, vector<8x32xf32> -> vector<8x32xf32>
    %37 = arith.addf %31, %36 : vector<8x32xf32>
    %cst_18 = arith.constant 0.000000e+00 : f32
    %38 = vector.broadcast %cst_18 : f32 to vector<8x32xf32>
    %39 = arith.maximumf %37, %38 : vector<8x32xf32>
    %c0_19 = arith.constant 0 : index
    %c0_20 = arith.constant 0 : index
    %40 = vector.load %arg4[%c0_19, %c0_20] : memref<8x32xf32, #tpu.memory_space<vmem>>, vector<8x32xf32>
    tpu.vector_store %arg4[%c0_19, %c0_20], %39 {strides = array<i32>} : memref<8x32xf32, #tpu.memory_space<vmem>>, vector<8x32xf32>,
    return
  }
  func.func @transform_0(%arg0: i32) -> (i32, i32, i32) {
    %c0_i32 = arith.constant 0 : i32
    %c0_i32_0 = arith.constant 0 : i32
    %c0_i32_1 = arith.constant 0 : i32
    return %c0_i32, %arg0, %c0_i32_0 : i32, i32, i32
  }
  func.func @transform_1(%arg0: i32) -> (i32, i32, i32) {
    %c0_i32 = arith.constant 0 : i32
    %c0_i32_0 = arith.constant 0 : i32
    %c0_i32_1 = arith.constant 0 : i32
    %c0_i32_2 = arith.constant 0 : i32
    return %c0_i32, %c0_i32_0, %c0_i32_1 : i32, i32, i32
  }
  func.func @transform_2(%arg0: i32) -> (i32, i32) {
    %c0_i32 = arith.constant 0 : i32
    %c0_i32_0 = arith.constant 0 : i32
    %c0_i32_1 = arith.constant 0 : i32
    return %c0_i32, %c0_i32_0 : i32, i32
  }
  func.func @transform_3(%arg0: i32) -> (i32, i32) {
    %c0_i32 = arith.constant 0 : i32
    %c0_i32_0 = arith.constant 0 : i32
    return %arg0, %c0_i32 : i32, i32
  }
}

module attributes {stable_mosaic.version = 11 : i64} {
  func.func @_mlp2_kernel(%arg0: memref<16x36xf32, #tpu.memory_space<vmem>>, %arg1: memref<36x32xf32, #tpu.memory_space<vmem>>, %arg2: memref<1x32xf32, #tpu.memory_space<vmem>>, %arg3: memref<32x4xf32, #tpu.memory_space<vmem>>, %arg4: memref<1x4xf32, #tpu.memory_space<vmem>>, %arg5: memref<16x4xf32, #tpu.memory_space<vmem>>) attributes {dimension_semantics = [], scalar_prefetch = 0 : i64, scratch_operands = 0 : i64, tpu.core_type = #tpu.core_type<tc>} {
    %c0 = arith.constant 0 : index
    %c0_0 = arith.constant 0 : index
    %0 = vector.load %arg0[%c0, %c0_0] : memref<16x36xf32, #tpu.memory_space<vmem>>, vector<16x36xf32>
    %c0_1 = arith.constant 0 : index
    %c0_2 = arith.constant 0 : index
    %1 = vector.load %arg1[%c0_1, %c0_2] : memref<36x32xf32, #tpu.memory_space<vmem>>, vector<36x32xf32>
    %cst = arith.constant dense<0.000000e+00> : vector<16x32xf32>
    %2 = tpu.matmul %0, %1, %cst {dimension_numbers = #tpu.dot_dimension_numbers<[1], [0], [0], [1], [0, 0, 1, 1], [], []>} : vector<16x36xf32>, vector<36x32xf32>, vector<16x32xf32> -> vector<16x32xf32>
    %c0_3 = arith.constant 0 : index
    %c0_4 = arith.constant 0 : index
    %3 = vector.load %arg2[%c0_3, %c0_4] : memref<1x32xf32, #tpu.memory_space<vmem>>, vector<1x32xf32>
    %4 = vector.broadcast %3 : vector<1x32xf32> to vector<16x32xf32>
    %5 = arith.addf %2, %4 : vector<16x32xf32>
    %cst_5 = arith.constant 0.000000e+00 : f32
    %6 = vector.broadcast %cst_5 : f32 to vector<16x32xf32>
    %7 = arith.maximumf %5, %6 : vector<16x32xf32>
    %c0_6 = arith.constant 0 : index
    %c0_7 = arith.constant 0 : index
    %8 = vector.load %arg3[%c0_6, %c0_7] : memref<32x4xf32, #tpu.memory_space<vmem>>, vector<32x4xf32>
    %cst_8 = arith.constant dense<0.000000e+00> : vector<16x4xf32>
    %9 = tpu.matmul %7, %8, %cst_8 {dimension_numbers = #tpu.dot_dimension_numbers<[1], [0], [0], [1], [0, 0, 1, 1], [], []>} : vector<16x32xf32>, vector<32x4xf32>, vector<16x4xf32> -> vector<16x4xf32>
    %c0_9 = arith.constant 0 : index
    %c0_10 = arith.constant 0 : index
    %10 = vector.load %arg4[%c0_9, %c0_10] : memref<1x4xf32, #tpu.memory_space<vmem>>, vector<1x4xf32>
    %11 = vector.broadcast %10 : vector<1x4xf32> to vector<16x4xf32>
    %12 = arith.addf %9, %11 : vector<16x4xf32>
    %c0_11 = arith.constant 0 : index
    %c0_12 = arith.constant 0 : index
    %13 = vector.load %arg5[%c0_11, %c0_12] : memref<16x4xf32, #tpu.memory_space<vmem>>, vector<16x4xf32>
    tpu.vector_store %arg5[%c0_11, %c0_12], %12 {strides = array<i32>} : memref<16x4xf32, #tpu.memory_space<vmem>>, vector<16x4xf32>,
    return
  }
}

module attributes {stable_mosaic.version = 11 : i64} {
  func.func @_mlp2_kernel(%arg0: memref<16x32xf32, #tpu.memory_space<vmem>>, %arg1: memref<32x16xf32, #tpu.memory_space<vmem>>, %arg2: memref<1x16xf32, #tpu.memory_space<vmem>>, %arg3: memref<16x1xf32, #tpu.memory_space<vmem>>, %arg4: memref<1x1xf32, #tpu.memory_space<vmem>>, %arg5: memref<16x1xf32, #tpu.memory_space<vmem>>) attributes {dimension_semantics = [], scalar_prefetch = 0 : i64, scratch_operands = 0 : i64, tpu.core_type = #tpu.core_type<tc>} {
    %c0 = arith.constant 0 : index
    %c0_0 = arith.constant 0 : index
    %0 = vector.load %arg0[%c0, %c0_0] : memref<16x32xf32, #tpu.memory_space<vmem>>, vector<16x32xf32>
    %c0_1 = arith.constant 0 : index
    %c0_2 = arith.constant 0 : index
    %1 = vector.load %arg1[%c0_1, %c0_2] : memref<32x16xf32, #tpu.memory_space<vmem>>, vector<32x16xf32>
    %cst = arith.constant dense<0.000000e+00> : vector<16x16xf32>
    %2 = tpu.matmul %0, %1, %cst {dimension_numbers = #tpu.dot_dimension_numbers<[1], [0], [0], [1], [0, 0, 1, 1], [], []>} : vector<16x32xf32>, vector<32x16xf32>, vector<16x16xf32> -> vector<16x16xf32>
    %c0_3 = arith.constant 0 : index
    %c0_4 = arith.constant 0 : index
    %3 = vector.load %arg2[%c0_3, %c0_4] : memref<1x16xf32, #tpu.memory_space<vmem>>, vector<1x16xf32>
    %4 = vector.broadcast %3 : vector<1x16xf32> to vector<16x16xf32>
    %5 = arith.addf %2, %4 : vector<16x16xf32>
    %cst_5 = arith.constant 0.000000e+00 : f32
    %6 = vector.broadcast %cst_5 : f32 to vector<16x16xf32>
    %7 = arith.maximumf %5, %6 : vector<16x16xf32>
    %c0_6 = arith.constant 0 : index
    %c0_7 = arith.constant 0 : index
    %8 = vector.load %arg3[%c0_6, %c0_7] : memref<16x1xf32, #tpu.memory_space<vmem>>, vector<16x1xf32>
    %cst_8 = arith.constant dense<0.000000e+00> : vector<16x1xf32>
    %9 = tpu.matmul %7, %8, %cst_8 {dimension_numbers = #tpu.dot_dimension_numbers<[1], [0], [0], [1], [0, 0, 1, 1], [], []>} : vector<16x16xf32>, vector<16x1xf32>, vector<16x1xf32> -> vector<16x1xf32>
    %c0_9 = arith.constant 0 : index
    %c0_10 = arith.constant 0 : index
    %10 = vector.load %arg4[%c0_9, %c0_10] : memref<1x1xf32, #tpu.memory_space<vmem>>, vector<1x1xf32>
    %11 = vector.broadcast %10 : vector<1x1xf32> to vector<16x1xf32>
    %12 = arith.addf %9, %11 : vector<16x1xf32>
    %cst_11 = arith.constant 0.000000e+00 : f32
    %13 = vector.broadcast %cst_11 : f32 to vector<16x1xf32>
    %14 = arith.subf %13, %12 : vector<16x1xf32>
    %15 = math.exp %14 : vector<16x1xf32>
    %cst_12 = arith.constant 1.000000e+00 : f32
    %16 = vector.broadcast %cst_12 : f32 to vector<16x1xf32>
    %17 = arith.addf %16, %15 : vector<16x1xf32>
    %cst_13 = arith.constant 1.000000e+00 : f32
    %18 = vector.broadcast %cst_13 : f32 to vector<16x1xf32>
    %19 = arith.divf %18, %17 : vector<16x1xf32>
    %c0_14 = arith.constant 0 : index
    %c0_15 = arith.constant 0 : index
    %20 = vector.load %arg5[%c0_14, %c0_15] : memref<16x1xf32, #tpu.memory_space<vmem>>, vector<16x1xf32>
    tpu.vector_store %arg5[%c0_14, %c0_15], %19 {strides = array<i32>} : memref<16x1xf32, #tpu.memory_space<vmem>>, vector<16x1xf32>,
    return
  }
}

</mosaic_0001>

<llo_original>
// kernel: magnn_forward.14
$region0: #{magnn_forward.14}
  #allocation0 [shape = 'u32[]', space=smem, size = 0x4, offset = 0x4, fixed_abs, tag = 'smem constant byte address 0x4 - core index']
  #allocation1 [shape = 'u32[144,128]{1,0:T(1,128)}', space=vmem, size = 0x12000, scoped, tag = 'internal scratch']
  %s0 = inlined_call_operand.vmem [shape: f32[32,6], index: 0, kind: input, shape index: {}]
  %s1 = inlined_call_operand.vmem [shape: f32[6,32], index: 1, kind: input, shape index: {}]
  %s2 = inlined_call_operand.vmem [shape: f32[1,32], index: 2, kind: input, shape index: {}]
  %s3 = inlined_call_operand.vmem [shape: f32[32,32], index: 3, kind: output, shape index: {}]
  %s4 = sld [smem:[#allocation0]]
  $region22: #{magnn_forward.14} parent=0
    _
  %s6 = ssub.s32 1, %s4
  %s7 = scalar_select 0, %s6, %s4
  // Predicated region
  $region2: #{magnn_forward.14} parent=0 // pred_check
    _
  $region3: #{magnn_forward.14} parent=0 // pred_check_branch
    %9 = sbr.rel (0) target = $region5
  $region4: #{magnn_forward.14} parent=0 // pred_region
    _
  $region5: #{magnn_forward.14} parent=0 // pred_fallthru
    _
  // Predicated region
  $region6: #{magnn_forward.14} parent=0 // pred_check
    _
  $region7: #{magnn_forward.14} parent=0 // pred_check_branch
    %11 = sbr.rel (0) target = $region9
  $region8: #{magnn_forward.14} parent=0 // pred_region
    _
  $region9: #{magnn_forward.14} parent=0 // pred_fallthru
    _
  // Predicated region
  $region10: #{magnn_forward.14} parent=0 // pred_check
    _
  $region11: #{magnn_forward.14} parent=0 // pred_check_branch
    %13 = sbr.rel (0) target = $region13
  $region12: #{magnn_forward.14} parent=0 // pred_region
    _
  $region13: #{magnn_forward.14} parent=0 // pred_fallthru
    _
  %v14 = vld [vmem:[%s0] sm:$0xff]
  %v15 = vld [vmem:[%s0 + $0x8] sm:$0xff]
  %v16 = vld [vmem:[%s0 + $0x10] sm:$0xff]
  %v17 = vld [vmem:[%s0 + $0x18] sm:$0xff]
  %v18 = vld [vmem:[%s1] sm:$0x3f]
  %v19 = vld [vmem:[%s2] sm:$0x1]
  %v21 = vlaneseq
  %v22 = vshrl.u32 %v21, 7
  %v23 = vsub.s32 0, %v22
  %v24 = vrot.slane %v19, %v23
  %vm26 = vcmask 48128
  %v28 = vsel %vm26, %v14, 0
  %v31 = vsel %vm26, %v15, 0
  %v34 = vsel %vm26, %v16, 0
  %v37 = vsel %vm26, %v17, 0
  %vm39 = vcmask 1045504
  %v41 = vsel %vm39, %v18, 0
  %43 = vmatprep.subr.mxu0 0.0
  %44 = vmatpush1.msra.mxu0 0.0
  %45 = vmatprep.subr.mxu0 0.0
  %46 = vmatpush1.msra.mxu0 0.0
  %47 = vmatprep.subr.mxu0 0.0
  %48 = vmatpush1.msra.mxu0 0.0
  %49 = vmatprep.subr.mxu0 0.0
  %50 = vmatpush1.msra.mxu0 0.0
  %51 = vmatprep.subr.mxu0 0.0
  %52 = vmatpush1.msra.mxu0 0.0
  %53 = vmatprep.subr.mxu0 0.0
  %54 = vmatpush1.msra.mxu0 0.0
  %55 = vmatprep.subr.mxu0 0.0
  %56 = vmatpush1.msra.mxu0 0.0
  %57 = vmatprep.subr.mxu0 0.0
  %58 = vmatpush1.msra.mxu0 0.0
  %59 = vmatprep.subr.mxu0 0.0
  %60 = vmatpush1.msra.mxu0 0.0
  %61 = vmatprep.subr.mxu0 0.0
  %62 = vmatpush1.msra.mxu0 0.0
  %63 = vmatprep.subr.mxu0 0.0
  %64 = vmatpush1.msra.mxu0 0.0
  %65 = vmatprep.subr.mxu0 0.0
  %66 = vmatpush1.msra.mxu0 0.0
  %67 = vmatprep.subr.mxu0 0.0
  %68 = vmatpush1.msra.mxu0 0.0
  %69 = vmatprep.subr.mxu0 0.0
  %70 = vmatpush1.msra.mxu0 0.0
  %71 = vmatprep.subr.mxu0 0.0
  %72 = vmatpush1.msra.mxu0 0.0
  %73 = vmatprep.subr.mxu0 0.0
  %74 = vmatpush1.msra.mxu0 %v41
  %75 = vmatprep.subr.mxu0 0.0
  %76 = vmatpush2.msra.mxu0 0.0
  %77 = vmatprep.subr.mxu0 0.0
  %78 = vmatpush2.msra.mxu0 0.0
  %79 = vmatprep.subr.mxu0 0.0
  %80 = vmatpush2.msra.mxu0 0.0
  %81 = vmatprep.subr.mxu0 0.0
  %82 = vmatpush2.msra.mxu0 0.0
  %83 = vmatprep.subr.mxu0 0.0
  %84 = vmatpush2.msra.mxu0 0.0
  %85 = vmatprep.subr.mxu0 0.0
  %86 = vmatpush2.msra.mxu0 0.0
  %87 = vmatprep.subr.mxu0 0.0
  %88 = vmatpush2.msra.mxu0 0.0
  %89 = vmatprep.subr.mxu0 0.0
  %90 = vmatpush2.msra.mxu0 0.0
  %91 = vmatprep.subr.mxu0 0.0
  %92 = vmatpush2.msra.mxu0 0.0
  %93 = vmatprep.subr.mxu0 0.0
  %94 = vmatpush2.msra.mxu0 0.0
  %95 = vmatprep.subr.mxu0 0.0
  %96 = vmatpush2.msra.mxu0 0.0
  %97 = vmatprep.subr.mxu0 0.0
  %98 = vmatpush2.msra.mxu0 0.0
  %99 = vmatprep.subr.mxu0 0.0
  %100 = vmatpush2.msra.mxu0 0.0
  %101 = vmatprep.subr.mxu0 0.0
  %102 = vmatpush2.msra.mxu0 0.0
  %103 = vmatprep.subr.mxu0 0.0
  %104 = vmatpush2.msra.mxu0 0.0
  %105 = vmatprep.subr.mxu0 0.0
  %106 = vmatpush2.msra.mxu0 0.0
  %107 = vmatprep.mubr.f32.mxu0 0.0
  %108 = vmatmul.mubr.f32.gmra.mxu0 %v28
  %v109 = vpop.f32.mrf.mxu0
  %v110 = vadd.f32 %v24, %v109
  %v111 = vpop.f32.mrf.mxu0
  %112 = vmatprep.mubr.f32.mxu0 0.0
  %113 = vmatmul.mubr.f32.gmra.mxu0 %v31
  %v114 = vpop.f32.mrf.mxu0
  %v115 = vadd.f32 %v24, %v114
  %v116 = vpop.f32.mrf.mxu0
  %117 = vmatprep.mubr.f32.mxu0 0.0
  %118 = vmatmul.mubr.f32.gmra.mxu0 %v34
  %v119 = vpop.f32.mrf.mxu0
  %v120 = vadd.f32 %v24, %v119
  %v121 = vpop.f32.mrf.mxu0
  %122 = vmatprep.mubr.f32.mxu0 0.0
  %123 = vmatmul.mubr.f32.gmra.mxu0 %v37
  %v124 = vpop.f32.mrf.mxu0
  %v125 = vadd.f32 %v24, %v124
  %v126 = vpop.f32.mrf.mxu0
  %127 = vdwg.mxu0
  %vm128 = vcmask 261120
  %129 = vst.msk [vmem:[%s3] sm:$0xff] %vm128, %v110
  %130 = vst.msk [vmem:[%s3 + $0x8] sm:$0xff] %vm128, %v115
  %131 = vst.msk [vmem:[%s3 + $0x10] sm:$0xff] %vm128, %v120
  %132 = vst.msk [vmem:[%s3 + $0x18] sm:$0xff] %vm128, %v125
  // Predicated region
  $region14: #{magnn_forward.14} parent=0 // pred_check
    _
  $region15: #{magnn_forward.14} parent=0 // pred_check_branch
    %134 = sbr.rel (0) target = $region17
  $region16: #{magnn_forward.14} parent=0 // pred_region
    _
  $region17: #{magnn_forward.14} parent=0 // pred_fallthru
    _
  // Predicated region
  $region18: #{magnn_forward.14} parent=0 // pred_check
    _
  $region19: #{magnn_forward.14} parent=0 // pred_check_branch
    %136 = sbr.rel (0) target = $region21
  $region20: #{magnn_forward.14} parent=0 // pred_region
    _
  $region21: #{magnn_forward.14} parent=0 // pred_fallthru
    _

// kernel: magnn_forward.16
$region0: #{magnn_forward.16}
  #allocation0 [shape = 'u32[]', space=smem, size = 0x4, offset = 0x4, fixed_abs, tag = 'smem constant byte address 0x4 - core index']
  #allocation1 [shape = 'u32[144,128]{1,0:T(1,128)}', space=vmem, size = 0x12000, scoped, tag = 'internal scratch']
  %s0 = inlined_call_operand.vmem [shape: f32[32,32], index: 0, kind: input, shape index: {}]
  %s1 = inlined_call_operand.vmem [shape: f32[32,4], index: 1, kind: input, shape index: {}]
  %s2 = inlined_call_operand.vmem [shape: f32[1,4], index: 2, kind: input, shape index: {}]
  %s3 = inlined_call_operand.vmem [shape: f32[32,4], index: 3, kind: output, shape index: {}]
  %s4 = sld [smem:[#allocation0]]
  $region22: #{magnn_forward.16} parent=0
    _
  %s6 = ssub.s32 1, %s4
  %s7 = scalar_select 0, %s6, %s4
  // Predicated region
  $region2: #{magnn_forward.16} parent=0 // pred_check
    _
  $region3: #{magnn_forward.16} parent=0 // pred_check_branch
    %9 = sbr.rel (0) target = $region5
  $region4: #{magnn_forward.16} parent=0 // pred_region
    _
  $region5: #{magnn_forward.16} parent=0 // pred_fallthru
    _
  // Predicated region
  $region6: #{magnn_forward.16} parent=0 // pred_check
    _
  $region7: #{magnn_forward.16} parent=0 // pred_check_branch
    %11 = sbr.rel (0) target = $region9
  $region8: #{magnn_forward.16} parent=0 // pred_region
    _
  $region9: #{magnn_forward.16} parent=0 // pred_fallthru
    _
  // Predicated region
  $region10: #{magnn_forward.16} parent=0 // pred_check
    _
  $region11: #{magnn_forward.16} parent=0 // pred_check_branch
    %13 = sbr.rel (0) target = $region13
  $region12: #{magnn_forward.16} parent=0 // pred_region
    _
  $region13: #{magnn_forward.16} parent=0 // pred_fallthru
    _
  %v14 = vld [vmem:[%s0] sm:$0xff]
  %v15 = vld [vmem:[%s0 + $0x8] sm:$0xff]
  %v16 = vld [vmem:[%s0 + $0x10] sm:$0xff]
  %v17 = vld [vmem:[%s0 + $0x18] sm:$0xff]
  %v18 = vld [vmem:[%s1] sm:$0xff]
  %v19 = vld [vmem:[%s1 + $0x8] sm:$0xff]
  %v20 = vld [vmem:[%s1 + $0x10] sm:$0xff]
  %v21 = vld [vmem:[%s1 + $0x18] sm:$0xff]
  %v22 = vld [vmem:[%s2] sm:$0x1]
  %v24 = vlaneseq
  %v25 = vshrl.u32 %v24, 7
  %v26 = vsub.s32 0, %v25
  %v27 = vrot.slane %v22, %v26
  %vm29 = vcmask 261120
  %v31 = vsel %vm29, %v14, 0
  %v34 = vsel %vm29, %v15, 0
  %v37 = vsel %vm29, %v16, 0
  %v40 = vsel %vm29, %v17, 0
  %42 = vmatprep.subr.mxu0 0.0
  %43 = vmatpush1.msra.mxu0 0.0
  %44 = vmatprep.subr.mxu0 0.0
  %45 = vmatpush1.msra.mxu0 0.0
  %46 = vmatprep.subr.mxu0 0.0
  %47 = vmatpush1.msra.mxu0 0.0
  %48 = vmatprep.subr.mxu0 0.0
  %49 = vmatpush1.msra.mxu0 0.0
  %50 = vmatprep.subr.mxu0 0.0
  %51 = vmatpush1.msra.mxu0 0.0
  %52 = vmatprep.subr.mxu0 0.0
  %53 = vmatpush1.msra.mxu0 0.0
  %54 = vmatprep.subr.mxu0 0.0
  %55 = vmatpush1.msra.mxu0 0.0
  %56 = vmatprep.subr.mxu0 0.0
  %57 = vmatpush1.msra.mxu0 0.0
  %58 = vmatprep.subr.mxu0 0.0
  %59 = vmatpush1.msra.mxu0 0.0
  %60 = vmatprep.subr.mxu0 0.0
  %61 = vmatpush1.msra.mxu0 0.0
  %62 = vmatprep.subr.mxu0 0.0
  %63 = vmatpush1.msra.mxu0 0.0
  %64 = vmatprep.subr.mxu0 0.0
  %65 = vmatpush1.msra.mxu0 0.0
  %66 = vmatprep.subr.mxu0 0.0
  %67 = vmatpush1.msra.mxu0 %v21
  %68 = vmatprep.subr.mxu0 0.0
  %69 = vmatpush1.msra.mxu0 %v20
  %70 = vmatprep.subr.mxu0 0.0
  %71 = vmatpush1.msra.mxu0 %v19
  %72 = vmatprep.subr.mxu0 0.0
  %73 = vmatpush1.msra.mxu0 %v18
  %74 = vmatprep.subr.mxu0 0.0
  %75 = vmatpush2.msra.mxu0 0.0
  %76 = vmatprep.subr.mxu0 0.0
  %77 = vmatpush2.msra.mxu0 0.0
  %78 = vmatprep.subr.mxu0 0.0
  %79 = vmatpush2.msra.mxu0 0.0
  %80 = vmatprep.subr.mxu0 0.0
  %81 = vmatpush2.msra.mxu0 0.0
  %82 = vmatprep.subr.mxu0 0.0
  %83 = vmatpush2.msra.mxu0 0.0
  %84 = vmatprep.subr.mxu0 0.0
  %85 = vmatpush2.msra.mxu0 0.0
  %86 = vmatprep.subr.mxu0 0.0
  %87 = vmatpush2.msra.mxu0 0.0
  %88 = vmatprep.subr.mxu0 0.0
  %89 = vmatpush2.msra.mxu0 0.0
  %90 = vmatprep.subr.mxu0 0.0
  %91 = vmatpush2.msra.mxu0 0.0
  %92 = vmatprep.subr.mxu0 0.0
  %93 = vmatpush2.msra.mxu0 0.0
  %94 = vmatprep.subr.mxu0 0.0
  %95 = vmatpush2.msra.mxu0 0.0
  %96 = vmatprep.subr.mxu0 0.0
  %97 = vmatpush2.msra.mxu0 0.0
  %98 = vmatprep.subr.mxu0 0.0
  %99 = vmatpush2.msra.mxu0 0.0
  %100 = vmatprep.subr.mxu0 0.0
  %101 = vmatpush2.msra.mxu0 0.0
  %102 = vmatprep.subr.mxu0 0.0
  %103 = vmatpush2.msra.mxu0 0.0
  %104 = vmatprep.subr.mxu0 0.0
  %105 = vmatpush2.msra.mxu0 0.0
  %106 = vmatprep.mubr.f32.mxu0 0.0
  %107 = vmatmul.mubr.f32.gmra.mxu0 %v31
  %v108 = vpop.f32.mrf.mxu0
  %v109 = vadd.f32 %v27, %v108
  %v110 = vpop.f32.mrf.mxu0
  %111 = vmatprep.mubr.f32.mxu0 0.0
  %112 = vmatmul.mubr.f32.gmra.mxu0 %v34
  %v113 = vpop.f32.mrf.mxu0
  %v114 = vadd.f32 %v27, %v113
  %v115 = vpop.f32.mrf.mxu0
  %116 = vmatprep.mubr.f32.mxu0 0.0
  %117 = vmatmul.mubr.f32.gmra.mxu0 %v37
  %v118 = vpop.f32.mrf.mxu0
  %v119 = vadd.f32 %v27, %v118
  %v120 = vpop.f32.mrf.mxu0
  %121 = vmatprep.mubr.f32.mxu0 0.0
  %122 = vmatmul.mubr.f32.gmra.mxu0 %v40
  %v123 = vpop.f32.mrf.mxu0
  %v124 = vadd.f32 %v27, %v123
  %v125 = vpop.f32.mrf.mxu0
  %126 = vdwg.mxu0
  %vm127 = vcmask 31744
  %128 = vst.msk [vmem:[%s3] sm:$0xff] %vm127, %v109
  %129 = vst.msk [vmem:[%s3 + $0x8] sm:$0xff] %vm127, %v114
  %130 = vst.msk [vmem:[%s3 + $0x10] sm:$0xff] %vm127, %v119
  %131 = vst.msk [vmem:[%s3 + $0x18] sm:$0xff] %vm127, %v124
  // Predicated region
  $region14: #{magnn_forward.16} parent=0 // pred_check
    _
  $region15: #{magnn_forward.16} parent=0 // pred_check_branch
    %133 = sbr.rel (0) target = $region17
  $region16: #{magnn_forward.16} parent=0 // pred_region
    _
  $region17: #{magnn_forward.16} parent=0 // pred_fallthru
    _
  // Predicated region
  $region18: #{magnn_forward.16} parent=0 // pred_check
    _
  $region19: #{magnn_forward.16} parent=0 // pred_check_branch
    %135 = sbr.rel (0) target = $region21
  $region20: #{magnn_forward.16} parent=0 // pred_region
    _
  $region21: #{magnn_forward.16} parent=0 // pred_fallthru
    _

// kernel: magnn_forward.13
$region0: #{magnn_forward.13}
  #allocation0 [shape = 'u32[]', space=smem, size = 0x4, offset = 0x4, fixed_abs, tag = 'smem constant byte address 0x4 - core index']
  #allocation1 [shape = 'u32[144,128]{1,0:T(1,128)}', space=vmem, size = 0x12000, scoped, tag = 'internal scratch']
  %s0 = inlined_call_operand.vmem [shape: f32[16,8], index: 0, kind: input, shape index: {}]
  %s1 = inlined_call_operand.vmem [shape: f32[8,32], index: 1, kind: input, shape index: {}]
  %s2 = inlined_call_operand.vmem [shape: f32[1,32], index: 2, kind: input, shape index: {}]
  %s3 = inlined_call_operand.vmem [shape: f32[16,32], index: 3, kind: output, shape index: {}]
  %s4 = sld [smem:[#allocation0]]
  $region22: #{magnn_forward.13} parent=0
    _
  %s6 = ssub.s32 1, %s4
  %s7 = scalar_select 0, %s6, %s4
  // Predicated region
  $region2: #{magnn_forward.13} parent=0 // pred_check
    _
  $region3: #{magnn_forward.13} parent=0 // pred_check_branch
    %9 = sbr.rel (0) target = $region5
  $region4: #{magnn_forward.13} parent=0 // pred_region
    _
  $region5: #{magnn_forward.13} parent=0 // pred_fallthru
    _
  // Predicated region
  $region6: #{magnn_forward.13} parent=0 // pred_check
    _
  $region7: #{magnn_forward.13} parent=0 // pred_check_branch
    %11 = sbr.rel (0) target = $region9
  $region8: #{magnn_forward.13} parent=0 // pred_region
    _
  $region9: #{magnn_forward.13} parent=0 // pred_fallthru
    _
  // Predicated region
  $region10: #{magnn_forward.13} parent=0 // pred_check
    _
  $region11: #{magnn_forward.13} parent=0 // pred_check_branch
    %13 = sbr.rel (0) target = $region13
  $region12: #{magnn_forward.13} parent=0 // pred_region
    _
  $region13: #{magnn_forward.13} parent=0 // pred_fallthru
    _
  %v14 = vld [vmem:[%s0] sm:$0xff]
  %v15 = vld [vmem:[%s0 + $0x8] sm:$0xff]
  %v16 = vld [vmem:[%s1] sm:$0xff]
  %v17 = vld [vmem:[%s2] sm:$0x1]
  %v19 = vlaneseq
  %v20 = vshrl.u32 %v19, 7
  %v21 = vsub.s32 0, %v20
  %v22 = vrot.slane %v17, %v21
  %vm24 = vcmask 64512
  %v26 = vsel %vm24, %v14, 0
  %v29 = vsel %vm24, %v15, 0
  %31 = vmatprep.subr.mxu0 0.0
  %32 = vmatpush1.msra.mxu0 0.0
  %33 = vmatprep.subr.mxu0 0.0
  %34 = vmatpush1.msra.mxu0 0.0
  %35 = vmatprep.subr.mxu0 0.0
  %36 = vmatpush1.msra.mxu0 0.0
  %37 = vmatprep.subr.mxu0 0.0
  %38 = vmatpush1.msra.mxu0 0.0
  %39 = vmatprep.subr.mxu0 0.0
  %40 = vmatpush1.msra.mxu0 0.0
  %41 = vmatprep.subr.mxu0 0.0
  %42 = vmatpush1.msra.mxu0 0.0
  %43 = vmatprep.subr.mxu0 0.0
  %44 = vmatpush1.msra.mxu0 0.0
  %45 = vmatprep.subr.mxu0 0.0
  %46 = vmatpush1.msra.mxu0 0.0
  %47 = vmatprep.subr.mxu0 0.0
  %48 = vmatpush1.msra.mxu0 0.0
  %49 = vmatprep.subr.mxu0 0.0
  %50 = vmatpush1.msra.mxu0 0.0
  %51 = vmatprep.subr.mxu0 0.0
  %52 = vmatpush1.msra.mxu0 0.0
  %53 = vmatprep.subr.mxu0 0.0
  %54 = vmatpush1.msra.mxu0 0.0
  %55 = vmatprep.subr.mxu0 0.0
  %56 = vmatpush1.msra.mxu0 0.0
  %57 = vmatprep.subr.mxu0 0.0
  %58 = vmatpush1.msra.mxu0 0.0
  %59 = vmatprep.subr.mxu0 0.0
  %60 = vmatpush1.msra.mxu0 0.0
  %61 = vmatprep.subr.mxu0 0.0
  %62 = vmatpush1.msra.mxu0 %v16
  %63 = vmatprep.subr.mxu0 0.0
  %64 = vmatpush2.msra.mxu0 0.0
  %65 = vmatprep.subr.mxu0 0.0
  %66 = vmatpush2.msra.mxu0 0.0
  %67 = vmatprep.subr.mxu0 0.0
  %68 = vmatpush2.msra.mxu0 0.0
  %69 = vmatprep.subr.mxu0 0.0
  %70 = vmatpush2.msra.mxu0 0.0
  %71 = vmatprep.subr.mxu0 0.0
  %72 = vmatpush2.msra.mxu0 0.0
  %73 = vmatprep.subr.mxu0 0.0
  %74 = vmatpush2.msra.mxu0 0.0
  %75 = vmatprep.subr.mxu0 0.0
  %76 = vmatpush2.msra.mxu0 0.0
  %77 = vmatprep.subr.mxu0 0.0
  %78 = vmatpush2.msra.mxu0 0.0
  %79 = vmatprep.subr.mxu0 0.0
  %80 = vmatpush2.msra.mxu0 0.0
  %81 = vmatprep.subr.mxu0 0.0
  %82 = vmatpush2.msra.mxu0 0.0
  %83 = vmatprep.subr.mxu0 0.0
  %84 = vmatpush2.msra.mxu0 0.0
  %85 = vmatprep.subr.mxu0 0.0
  %86 = vmatpush2.msra.mxu0 0.0
  %87 = vmatprep.subr.mxu0 0.0
  %88 = vmatpush2.msra.mxu0 0.0
  %89 = vmatprep.subr.mxu0 0.0
  %90 = vmatpush2.msra.mxu0 0.0
  %91 = vmatprep.subr.mxu0 0.0
  %92 = vmatpush2.msra.mxu0 0.0
  %93 = vmatprep.subr.mxu0 0.0
  %94 = vmatpush2.msra.mxu0 0.0
  %95 = vmatprep.mubr.f32.mxu0 0.0
  %96 = vmatmul.mubr.f32.gmra.mxu0 %v26
  %v97 = vpop.f32.mrf.mxu0
  %v98 = vadd.f32 %v22, %v97
  %v99 = vpop.f32.mrf.mxu0
  %100 = vmatprep.mubr.f32.mxu0 0.0
  %101 = vmatmul.mubr.f32.gmra.mxu0 %v29
  %v102 = vpop.f32.mrf.mxu0
  %v103 = vadd.f32 %v22, %v102
  %v104 = vpop.f32.mrf.mxu0
  %105 = vdwg.mxu0
  %vm106 = vcmask 261120
  %107 = vst.msk [vmem:[%s3] sm:$0xff] %vm106, %v98
  %108 = vst.msk [vmem:[%s3 + $0x8] sm:$0xff] %vm106, %v103
  // Predicated region
  $region14: #{magnn_forward.13} parent=0 // pred_check
    _
  $region15: #{magnn_forward.13} parent=0 // pred_check_branch
    %110 = sbr.rel (0) target = $region17
  $region16: #{magnn_forward.13} parent=0 // pred_region
    _
  $region17: #{magnn_forward.13} parent=0 // pred_fallthru
    _
  // Predicated region
  $region18: #{magnn_forward.13} parent=0 // pred_check
    _
  $region19: #{magnn_forward.13} parent=0 // pred_check_branch
    %112 = sbr.rel (0) target = $region21
  $region20: #{magnn_forward.13} parent=0 // pred_region
    _
  $region21: #{magnn_forward.13} parent=0 // pred_fallthru
    _

// kernel: magnn_forward.15
$region0: #{magnn_forward.15}
  #allocation0 [shape = 'u32[]', space=smem, size = 0x4, offset = 0x4, fixed_abs, tag = 'smem constant byte address 0x4 - core index']
  #allocation1 [shape = 'u32[144,128]{1,0:T(1,128)}', space=vmem, size = 0x12000, scoped, tag = 'internal scratch']
  %s0 = inlined_call_operand.vmem [shape: f32[16,32], index: 0, kind: input, shape index: {}]
  %s1 = inlined_call_operand.vmem [shape: f32[32,40], index: 1, kind: input, shape index: {}]
  %s2 = inlined_call_operand.vmem [shape: f32[1,40], index: 2, kind: input, shape index: {}]
  %s3 = inlined_call_operand.vmem [shape: f32[16,40], index: 3, kind: output, shape index: {}]
  %s4 = sld [smem:[#allocation0]]
  $region22: #{magnn_forward.15} parent=0
    _
  %s6 = ssub.s32 1, %s4
  %s7 = scalar_select 0, %s6, %s4
  // Predicated region
  $region2: #{magnn_forward.15} parent=0 // pred_check
    _
  $region3: #{magnn_forward.15} parent=0 // pred_check_branch
    %9 = sbr.rel (0) target = $region5
  $region4: #{magnn_forward.15} parent=0 // pred_region
    _
  $region5: #{magnn_forward.15} parent=0 // pred_fallthru
    _
  // Predicated region
  $region6: #{magnn_forward.15} parent=0 // pred_check
    _
  $region7: #{magnn_forward.15} parent=0 // pred_check_branch
    %11 = sbr.rel (0) target = $region9
  $region8: #{magnn_forward.15} parent=0 // pred_region
    _
  $region9: #{magnn_forward.15} parent=0 // pred_fallthru
    _
  // Predicated region
  $region10: #{magnn_forward.15} parent=0 // pred_check
    _
  $region11: #{magnn_forward.15} parent=0 // pred_check_branch
    %13 = sbr.rel (0) target = $region13
  $region12: #{magnn_forward.15} parent=0 // pred_region
    _
  $region13: #{magnn_forward.15} parent=0 // pred_fallthru
    _
  %v14 = vld [vmem:[%s0] sm:$0xff]
  %v15 = vld [vmem:[%s0 + $0x8] sm:$0xff]
  %v16 = vld [vmem:[%s1] sm:$0xff]
  %v17 = vld [vmem:[%s1 + $0x8] sm:$0xff]
  %v18 = vld [vmem:[%s1 + $0x10] sm:$0xff]
  %v19 = vld [vmem:[%s1 + $0x18] sm:$0xff]
  %v20 = vld [vmem:[%s2] sm:$0x1]
  %v22 = vlaneseq
  %v23 = vshrl.u32 %v22, 7
  %v24 = vsub.s32 0, %v23
  %v25 = vrot.slane %v20, %v24
  %vm27 = vcmask 261120
  %v29 = vsel %vm27, %v14, 0
  %v32 = vsel %vm27, %v15, 0
  %34 = vmatprep.subr.mxu0 0.0
  %35 = vmatpush1.msra.mxu0 0.0
  %36 = vmatprep.subr.mxu0 0.0
  %37 = vmatpush1.msra.mxu0 0.0
  %38 = vmatprep.subr.mxu0 0.0
  %39 = vmatpush1.msra.mxu0 0.0
  %40 = vmatprep.subr.mxu0 0.0
  %41 = vmatpush1.msra.mxu0 0.0
  %42 = vmatprep.subr.mxu0 0.0
  %43 = vmatpush1.msra.mxu0 0.0
  %44 = vmatprep.subr.mxu0 0.0
  %45 = vmatpush1.msra.mxu0 0.0
  %46 = vmatprep.subr.mxu0 0.0
  %47 = vmatpush1.msra.mxu0 0.0
  %48 = vmatprep.subr.mxu0 0.0
  %49 = vmatpush1.msra.mxu0 0.0
  %50 = vmatprep.subr.mxu0 0.0
  %51 = vmatpush1.msra.mxu0 0.0
  %52 = vmatprep.subr.mxu0 0.0
  %53 = vmatpush1.msra.mxu0 0.0
  %54 = vmatprep.subr.mxu0 0.0
  %55 = vmatpush1.msra.mxu0 0.0
  %56 = vmatprep.subr.mxu0 0.0
  %57 = vmatpush1.msra.mxu0 0.0
  %58 = vmatprep.subr.mxu0 0.0
  %59 = vmatpush1.msra.mxu0 %v19
  %60 = vmatprep.subr.mxu0 0.0
  %61 = vmatpush1.msra.mxu0 %v18
  %62 = vmatprep.subr.mxu0 0.0
  %63 = vmatpush1.msra.mxu0 %v17
  %64 = vmatprep.subr.mxu0 0.0
  %65 = vmatpush1.msra.mxu0 %v16
  %66 = vmatprep.subr.mxu0 0.0
  %67 = vmatpush2.msra.mxu0 0.0
  %68 = vmatprep.subr.mxu0 0.0
  %69 = vmatpush2.msra.mxu0 0.0
  %70 = vmatprep.subr.mxu0 0.0
  %71 = vmatpush2.msra.mxu0 0.0
  %72 = vmatprep.subr.mxu0 0.0
  %73 = vmatpush2.msra.mxu0 0.0
  %74 = vmatprep.subr.mxu0 0.0
  %75 = vmatpush2.msra.mxu0 0.0
  %76 = vmatprep.subr.mxu0 0.0
  %77 = vmatpush2.msra.mxu0 0.0
  %78 = vmatprep.subr.mxu0 0.0
  %79 = vmatpush2.msra.mxu0 0.0
  %80 = vmatprep.subr.mxu0 0.0
  %81 = vmatpush2.msra.mxu0 0.0
  %82 = vmatprep.subr.mxu0 0.0
  %83 = vmatpush2.msra.mxu0 0.0
  %84 = vmatprep.subr.mxu0 0.0
  %85 = vmatpush2.msra.mxu0 0.0
  %86 = vmatprep.subr.mxu0 0.0
  %87 = vmatpush2.msra.mxu0 0.0
  %88 = vmatprep.subr.mxu0 0.0
  %89 = vmatpush2.msra.mxu0 0.0
  %90 = vmatprep.subr.mxu0 0.0
  %91 = vmatpush2.msra.mxu0 0.0
  %92 = vmatprep.subr.mxu0 0.0
  %93 = vmatpush2.msra.mxu0 0.0
  %94 = vmatprep.subr.mxu0 0.0
  %95 = vmatpush2.msra.mxu0 0.0
  %96 = vmatprep.subr.mxu0 0.0
  %97 = vmatpush2.msra.mxu0 0.0
  %98 = vmatprep.mubr.f32.mxu0 0.0
  %99 = vmatmul.mubr.f32.gmra.mxu0 %v29
  %v100 = vpop.f32.mrf.mxu0
  %v101 = vadd.f32 %v25, %v100
  %v102 = vpop.f32.mrf.mxu0
  %103 = vmatprep.mubr.f32.mxu0 0.0
  %104 = vmatmul.mubr.f32.gmra.mxu0 %v32
  %v105 = vpop.f32.mrf.mxu0
  %v106 = vadd.f32 %v25, %v105
  %v107 = vpop.f32.mrf.mxu0
  %108 = vdwg.mxu0
  %vm109 = vcmask 326656
  %110 = vst.msk [vmem:[%s3] sm:$0xff] %vm109, %v101
  %111 = vst.msk [vmem:[%s3 + $0x8] sm:$0xff] %vm109, %v106
  // Predicated region
  $region14: #{magnn_forward.15} parent=0 // pred_check
    _
  $region15: #{magnn_forward.15} parent=0 // pred_check_branch
    %113 = sbr.rel (0) target = $region17
  $region16: #{magnn_forward.15} parent=0 // pred_region
    _
  $region17: #{magnn_forward.15} parent=0 // pred_fallthru
    _
  // Predicated region
  $region18: #{magnn_forward.15} parent=0 // pred_check
    _
  $region19: #{magnn_forward.15} parent=0 // pred_check_branch
    %115 = sbr.rel (0) target = $region21
  $region20: #{magnn_forward.15} parent=0 // pred_region
    _
  $region21: #{magnn_forward.15} parent=0 // pred_fallthru
    _

// kernel: magnn_forward.25
$region0: #{magnn_forward.25}
  #allocation0 [shape = 'u32[]', space=smem, size = 0x4, offset = 0x4, fixed_abs, tag = 'smem constant byte address 0x4 - core index']
  #allocation1 [shape = 'u32[144,128]{1,0:T(1,128)}', space=vmem, size = 0x12000, scoped, tag = 'internal scratch']
  %s0 = inlined_call_operand.vmem [shape: f32[16,36], index: 0, kind: input, shape index: {}]
  %s1 = inlined_call_operand.vmem [shape: f32[36,32], index: 1, kind: input, shape index: {}]
  %s2 = inlined_call_operand.vmem [shape: f32[1,32], index: 2, kind: input, shape index: {}]
  %s3 = inlined_call_operand.vmem [shape: f32[32,4], index: 3, kind: input, shape index: {}]
  %s4 = inlined_call_operand.vmem [shape: f32[1,4], index: 4, kind: input, shape index: {}]
  %s5 = inlined_call_operand.vmem [shape: f32[16,4], index: 5, kind: output, shape index: {}]
  %s6 = sld [smem:[#allocation0]]
  $region30: #{magnn_forward.25} parent=0
    _
  %s8 = ssub.s32 1, %s6
  %s9 = scalar_select 0, %s8, %s6
  // Predicated region
  $region2: #{magnn_forward.25} parent=0 // pred_check
    _
  $region3: #{magnn_forward.25} parent=0 // pred_check_branch
    %11 = sbr.rel (0) target = $region5
  $region4: #{magnn_forward.25} parent=0 // pred_region
    _
  $region5: #{magnn_forward.25} parent=0 // pred_fallthru
    _
  // Predicated region
  $region6: #{magnn_forward.25} parent=0 // pred_check
    _
  $region7: #{magnn_forward.25} parent=0 // pred_check_branch
    %13 = sbr.rel (0) target = $region9
  $region8: #{magnn_forward.25} parent=0 // pred_region
    _
  $region9: #{magnn_forward.25} parent=0 // pred_fallthru
    _
  // Predicated region
  $region10: #{magnn_forward.25} parent=0 // pred_check
    _
  $region11: #{magnn_forward.25} parent=0 // pred_check_branch
    %15 = sbr.rel (0) target = $region13
  $region12: #{magnn_forward.25} parent=0 // pred_region
    _
  $region13: #{magnn_forward.25} parent=0 // pred_fallthru
    _
  // Predicated region
  $region14: #{magnn_forward.25} parent=0 // pred_check
    _
  $region15: #{magnn_forward.25} parent=0 // pred_check_branch
    %17 = sbr.rel (0) target = $region17
  $region16: #{magnn_forward.25} parent=0 // pred_region
    _
  $region17: #{magnn_forward.25} parent=0 // pred_fallthru
    _
  // Predicated region
  $region18: #{magnn_forward.25} parent=0 // pred_check
    _
  $region19: #{magnn_forward.25} parent=0 // pred_check_branch
    %19 = sbr.rel (0) target = $region21
  $region20: #{magnn_forward.25} parent=0 // pred_region
    _
  $region21: #{magnn_forward.25} parent=0 // pred_fallthru
    _
  %v20 = vld [vmem:[%s0] sm:$0xff]
  %v21 = vld [vmem:[%s0 + $0x8] sm:$0xff]
  %v22 = vld [vmem:[%s1] sm:$0xff]
  %v23 = vld [vmem:[%s1 + $0x8] sm:$0xff]
  %v24 = vld [vmem:[%s1 + $0x10] sm:$0xff]
  %v25 = vld [vmem:[%s1 + $0x18] sm:$0xff]
  %v26 = vld [vmem:[%s1 + $0x20] sm:$0xf]
  %v27 = vld [vmem:[%s2] sm:$0x1]
  %v29 = vlaneseq
  %v30 = vshrl.u32 %v29, 7
  %v31 = vsub.s32 0, %v30
  %v32 = vrot.slane %v27, %v31
  %vm34 = vcmask 293888
  %v36 = vsel %vm34, %v20, 0
  %v39 = vsel %vm34, %v21, 0
  %vm41 = vcmask 1043456
  %v43 = vsel %vm41, %v26, 0
  %45 = vmatprep.subr.mxu0 0.0
  %46 = vmatpush1.msra.mxu0 0.0
  %47 = vmatprep.subr.mxu0 0.0
  %48 = vmatpush1.msra.mxu0 0.0
  %49 = vmatprep.subr.mxu0 0.0
  %50 = vmatpush1.msra.mxu0 0.0
  %51 = vmatprep.subr.mxu0 0.0
  %52 = vmatpush1.msra.mxu0 0.0
  %53 = vmatprep.subr.mxu0 0.0
  %54 = vmatpush1.msra.mxu0 0.0
  %55 = vmatprep.subr.mxu0 0.0
  %56 = vmatpush1.msra.mxu0 0.0
  %57 = vmatprep.subr.mxu0 0.0
  %58 = vmatpush1.msra.mxu0 0.0
  %59 = vmatprep.subr.mxu0 0.0
  %60 = vmatpush1.msra.mxu0 0.0
  %61 = vmatprep.subr.mxu0 0.0
  %62 = vmatpush1.msra.mxu0 0.0
  %63 = vmatprep.subr.mxu0 0.0
  %64 = vmatpush1.msra.mxu0 0.0
  %65 = vmatprep.subr.mxu0 0.0
  %66 = vmatpush1.msra.mxu0 0.0
  %67 = vmatprep.subr.mxu0 0.0
  %68 = vmatpush1.msra.mxu0 %v43
  %69 = vmatprep.subr.mxu0 0.0
  %70 = vmatpush1.msra.mxu0 %v25
  %71 = vmatprep.subr.mxu0 0.0
  %72 = vmatpush1.msra.mxu0 %v24
  %73 = vmatprep.subr.mxu0 0.0
  %74 = vmatpush1.msra.mxu0 %v23
  %75 = vmatprep.subr.mxu0 0.0
  %76 = vmatpush1.msra.mxu0 %v22
  %77 = vmatprep.subr.mxu0 0.0
  %78 = vmatpush2.msra.mxu0 0.0
  %79 = vmatprep.subr.mxu0 0.0
  %80 = vmatpush2.msra.mxu0 0.0
  %81 = vmatprep.subr.mxu0 0.0
  %82 = vmatpush2.msra.mxu0 0.0
  %83 = vmatprep.subr.mxu0 0.0
  %84 = vmatpush2.msra.mxu0 0.0
  %85 = vmatprep.subr.mxu0 0.0
  %86 = vmatpush2.msra.mxu0 0.0
  %87 = vmatprep.subr.mxu0 0.0
  %88 = vmatpush2.msra.mxu0 0.0
  %89 = vmatprep.subr.mxu0 0.0
  %90 = vmatpush2.msra.mxu0 0.0
  %91 = vmatprep.subr.mxu0 0.0
  %92 = vmatpush2.msra.mxu0 0.0
  %93 = vmatprep.subr.mxu0 0.0
  %94 = vmatpush2.msra.mxu0 0.0
  %95 = vmatprep.subr.mxu0 0.0
  %96 = vmatpush2.msra.mxu0 0.0
  %97 = vmatprep.subr.mxu0 0.0
  %98 = vmatpush2.msra.mxu0 0.0
  %99 = vmatprep.subr.mxu0 0.0
  %100 = vmatpush2.msra.mxu0 0.0
  %101 = vmatprep.subr.mxu0 0.0
  %102 = vmatpush2.msra.mxu0 0.0
  %103 = vmatprep.subr.mxu0 0.0
  %104 = vmatpush2.msra.mxu0 0.0
  %105 = vmatprep.subr.mxu0 0.0
  %106 = vmatpush2.msra.mxu0 0.0
  %107 = vmatprep.subr.mxu0 0.0
  %108 = vmatpush2.msra.mxu0 0.0
  %109 = vmatprep.mubr.f32.mxu0 0.0
  %110 = vmatmul.mubr.f32.gmra.mxu0 %v36
  %v111 = vpop.f32.mrf.mxu0
  %v112 = vadd.f32 %v32, %v111
  %v113 = vpop.f32.mrf.mxu0
  %114 = vmatprep.mubr.f32.mxu0 0.0
  %115 = vmatmul.mubr.f32.gmra.mxu0 %v39
  %v116 = vpop.f32.mrf.mxu0
  %v117 = vadd.f32 %v32, %v116
  %v118 = vpop.f32.mrf.mxu0
  %119 = vdwg.mxu0
  %v120 = vmax.f32 %v112, 0.0
  %v121 = vmax.f32 %v117, 0.0
  %v122 = vld [vmem:[%s3] sm:$0xff]
  %v123 = vld [vmem:[%s3 + $0x8] sm:$0xff]
  %v124 = vld [vmem:[%s3 + $0x10] sm:$0xff]
  %v125 = vld [vmem:[%s3 + $0x18] sm:$0xff]
  %v126 = vld [vmem:[%s4] sm:$0x1]
  %v128 = vlaneseq
  %v129 = vshrl.u32 %v128, 7
  %v130 = vsub.s32 0, %v129
  %v131 = vrot.slane %v126, %v130
  %vm133 = vcmask 261120
  %v135 = vsel %vm133, %v120, 0
  %v138 = vsel %vm133, %v121, 0
  %140 = vmatprep.subr.mxu0 0.0
  %141 = vmatpush1.msra.mxu0 0.0
  %142 = vmatprep.subr.mxu0 0.0
  %143 = vmatpush1.msra.mxu0 0.0
  %144 = vmatprep.subr.mxu0 0.0
  %145 = vmatpush1.msra.mxu0 0.0
  %146 = vmatprep.subr.mxu0 0.0
  %147 = vmatpush1.msra.mxu0 0.0
  %148 = vmatprep.subr.mxu0 0.0
  %149 = vmatpush1.msra.mxu0 0.0
  %150 = vmatprep.subr.mxu0 0.0
  %151 = vmatpush1.msra.mxu0 0.0
  %152 = vmatprep.subr.mxu0 0.0
  %153 = vmatpush1.msra.mxu0 0.0
  %154 = vmatprep.subr.mxu0 0.0
  %155 = vmatpush1.msra.mxu0 0.0
  %156 = vmatprep.subr.mxu0 0.0
  %157 = vmatpush1.msra.mxu0 0.0
  %158 = vmatprep.subr.mxu0 0.0
  %159 = vmatpush1.msra.mxu0 0.0
  %160 = vmatprep.subr.mxu0 0.0
  %161 = vmatpush1.msra.mxu0 0.0
  %162 = vmatprep.subr.mxu0 0.0
  %163 = vmatpush1.msra.mxu0 0.0
  %164 = vmatprep.subr.mxu0 0.0
  %165 = vmatpush1.msra.mxu0 %v125
  %166 = vmatprep.subr.mxu0 0.0
  %167 = vmatpush1.msra.mxu0 %v124
  %168 = vmatprep.subr.mxu0 0.0
  %169 = vmatpush1.msra.mxu0 %v123
  %170 = vmatprep.subr.mxu0 0.0
  %171 = vmatpush1.msra.mxu0 %v122
  %172 = vmatprep.subr.mxu0 0.0
  %173 = vmatpush2.msra.mxu0 0.0
  %174 = vmatprep.subr.mxu0 0.0
  %175 = vmatpush2.msra.mxu0 0.0
  %176 = vmatprep.subr.mxu0 0.0
  %177 = vmatpush2.msra.mxu0 0.0
  %178 = vmatprep.subr.mxu0 0.0
  %179 = vmatpush2.msra.mxu0 0.0
  %180 = vmatprep.subr.mxu0 0.0
  %181 = vmatpush2.msra.mxu0 0.0
  %182 = vmatprep.subr.mxu0 0.0
  %183 = vmatpush2.msra.mxu0 0.0
  %184 = vmatprep.subr.mxu0 0.0
  %185 = vmatpush2.msra.mxu0 0.0
  %186 = vmatprep.subr.mxu0 0.0
  %187 = vmatpush2.msra.mxu0 0.0
  %188 = vmatprep.subr.mxu0 0.0
  %189 = vmatpush2.msra.mxu0 0.0
  %190 = vmatprep.subr.mxu0 0.0
  %191 = vmatpush2.msra.mxu0 0.0
  %192 = vmatprep.subr.mxu0 0.0
  %193 = vmatpush2.msra.mxu0 0.0
  %194 = vmatprep.subr.mxu0 0.0
  %195 = vmatpush2.msra.mxu0 0.0
  %196 = vmatprep.subr.mxu0 0.0
  %197 = vmatpush2.msra.mxu0 0.0
  %198 = vmatprep.subr.mxu0 0.0
  %199 = vmatpush2.msra.mxu0 0.0
  %200 = vmatprep.subr.mxu0 0.0
  %201 = vmatpush2.msra.mxu0 0.0
  %202 = vmatprep.subr.mxu0 0.0
  %203 = vmatpush2.msra.mxu0 0.0
  %204 = vmatprep.mubr.f32.mxu0 0.0
  %205 = vmatmul.mubr.f32.gmra.mxu0 %v135
  %v206 = vpop.f32.mrf.mxu0
  %v207 = vadd.f32 %v131, %v206
  %v208 = vpop.f32.mrf.mxu0
  %209 = vmatprep.mubr.f32.mxu0 0.0
  %210 = vmatmul.mubr.f32.gmra.mxu0 %v138
  %v211 = vpop.f32.mrf.mxu0
  %v212 = vadd.f32 %v131, %v211
  %v213 = vpop.f32.mrf.mxu0
  %214 = vdwg.mxu0
  %vm215 = vcmask 31744
  %216 = vst.msk [vmem:[%s5] sm:$0xff] %vm215, %v207
  %217 = vst.msk [vmem:[%s5 + $0x8] sm:$0xff] %vm215, %v212
  // Predicated region
  $region22: #{magnn_forward.25} parent=0 // pred_check
    _
  $region23: #{magnn_forward.25} parent=0 // pred_check_branch
    %219 = sbr.rel (0) target = $region25
  $region24: #{magnn_forward.25} parent=0 // pred_region
    _
  $region25: #{magnn_forward.25} parent=0 // pred_fallthru
    _
  // Predicated region
  $region26: #{magnn_forward.25} parent=0 // pred_check
    _
  $region27: #{magnn_forward.25} parent=0 // pred_check_branch
    %221 = sbr.rel (0) target = $region29
  $region28: #{magnn_forward.25} parent=0 // pred_region
    _
  $region29: #{magnn_forward.25} parent=0 // pred_fallthru
    _

// kernel: magnn_forward.17
$region0: #{magnn_forward.17}
  #allocation0 [shape = 'u32[]', space=smem, size = 0x4, offset = 0x4, fixed_abs, tag = 'smem constant byte address 0x4 - core index']
  #allocation1 [shape = 'u32[144,128]{1,0:T(1,128)}', space=vmem, size = 0x12000, scoped, tag = 'internal scratch']
  %s0 = inlined_call_operand.vmem [shape: f32[4,16,16], index: 0, kind: input, shape index: {}]
  %s1 = inlined_call_operand.vmem [shape: bf16[4,16,32], index: 1, kind: input, shape index: {}]
  %s2 = inlined_call_operand.vmem [shape: f32[1,32], index: 2, kind: input, shape index: {}]
  %s3 = inlined_call_operand.vmem [shape: f32[16,32], index: 3, kind: output, shape index: {}]
  %s4 = sld [smem:[#allocation0]]
  $region83: #{magnn_forward.17} parent=0
    _
  %s6 = ssub.s32 1, %s4
  %s7 = scalar_select 0, %s6, %s4
  $region1: #{magnn_forward.17} parent=0
    #allocation2 [shape = 'u8[32768]{0}', space=vmem, size = 0x8000, scoped, tag = 'input window, operand 0']
    loop: start=0, step=1, limit=4
    $region2: #{magnn_forward.17} parent=1 // loop_pre_header
      _
    $region3: #{magnn_forward.17} parent=1 // loop_header
      %s9 = sphi 0, %s13
      %p10 = scmp.ge.s32.totalorder %s9, 4
      %s19 = sphi 0, %s21
      %s22 = sphi 0, %s19
      %s23 = sphi 0, %s22
      %s39 = sphi 0, %s23
      %s43 = sphi 0, %s43
      %s45 = sphi 0, %s43
      %s46 = sphi 0, %s45
      %s60 = sphi 0, %s46
      %s64 = sphi 0, %s64
      %s66 = sphi 0, %s64
      %s67 = sphi 0, %s66
      %s81 = sphi 0, %s67
      %s87 = sphi 0, %s89
      %s90 = sphi 0, %s87
      %s91 = sphi 0, %s90
      %s107 = sphi 0, %s91
    $region4: #{magnn_forward.17} parent=1 // loop_header_branch
      %12 = sbr.rel (%p10) target = $region8
    $region5: #{magnn_forward.17} parent=1 // loop_body
      %s14 = ssub.s32 %s9, 1
      %s15 = ssub.s32 %s9, 2
      %s16 = sadd.s32 %s9, 1
      %s17 = ssub.s32 %s9, %s16
      %p18 = scmp.eq.s32.totalorder %s17, 0
      %s20 = sadd.s32 %s19, 1
      %s21 = scalar_select %p18, %s19, %s20
      %p24 = pneg %p18
      %p25 = scmp.eq.s32.totalorder %s9, 1
      %p26 = por %p24, %p25
      %p27 = scmp.ne.s32.totalorder %s19, %s22
      %p28 = scmp.eq.s32.totalorder %s9, 0
      %p29 = por %p27, %p28
      %p30 = scmp.ne.s32.totalorder %s19, %s22
      %p31 = scmp.eq.s32.totalorder %s14, 1
      %p32 = por %p30, %p31
      %p33 = scmp.ne.s32.totalorder %s22, %s23
      %p34 = scmp.eq.s32.totalorder %s14, 0
      %p35 = por %p33, %p34
      %p36 = scmp.ne.s32.totalorder %s22, %s23
      %p37 = scmp.eq.s32.totalorder %s15, 1
      %p38 = por %p36, %p37
      %p40 = scmp.ne.s32.totalorder %s23, %s39
      %p41 = scmp.eq.s32.totalorder %s15, 0
      %p42 = por %p40, %p41
      %s44 = sadd.s32 %s43, 1
      %p47 = scmp.eq.s32.totalorder %s9, 1
      %p48 = scmp.ne.s32.totalorder %s43, %s45
      %p49 = scmp.eq.s32.totalorder %s9, 0
      %p50 = por %p48, %p49
      %p51 = scmp.ne.s32.totalorder %s43, %s45
      %p52 = scmp.eq.s32.totalorder %s14, 1
      %p53 = por %p51, %p52
      %p54 = scmp.ne.s32.totalorder %s45, %s46
      %p55 = scmp.eq.s32.totalorder %s14, 0
      %p56 = por %p54, %p55
      %p57 = scmp.ne.s32.totalorder %s45, %s46
      %p58 = scmp.eq.s32.totalorder %s15, 1
      %p59 = por %p57, %p58
      %p61 = scmp.ne.s32.totalorder %s46, %s60
      %p62 = scmp.eq.s32.totalorder %s15, 0
      %p63 = por %p61, %p62
      %s65 = sadd.s32 %s64, 1
      %p68 = scmp.eq.s32.totalorder %s9, 1
      %p69 = scmp.ne.s32.totalorder %s64, %s66
      %p70 = scmp.eq.s32.totalorder %s9, 0
      %p71 = por %p69, %p70
      %p72 = scmp.ne.s32.totalorder %s64, %s66
      %p73 = scmp.eq.s32.totalorder %s14, 1
      %p74 = por %p72, %p73
      %p75 = scmp.ne.s32.totalorder %s66, %s67
      %p76 = scmp.eq.s32.totalorder %s14, 0
      %p77 = por %p75, %p76
      %p78 = scmp.ne.s32.totalorder %s66, %s67
      %p79 = scmp.eq.s32.totalorder %s15, 1
      %p80 = por %p78, %p79
      %p82 = scmp.ne.s32.totalorder %s67, %s81
      %p83 = scmp.eq.s32.totalorder %s15, 0
      %p84 = por %p82, %p83
      %s85 = ssub.s32 %s9, %s16
      %p86 = scmp.eq.s32.totalorder %s85, 0
      %s88 = sadd.s32 %s87, 1
      %s89 = scalar_select %p86, %s87, %s88
      %p92 = pneg %p86
      %p93 = scmp.eq.s32.totalorder %s9, 1
      %p94 = por %p92, %p93
      %p95 = scmp.ne.s32.totalorder %s87, %s90
      %p96 = scmp.eq.s32.totalorder %s9, 0
      %p97 = por %p95, %p96
      %p98 = scmp.ne.s32.totalorder %s87, %s90
      %p99 = scmp.eq.s32.totalorder %s14, 1
      %p100 = por %p98, %p99
      %p101 = scmp.ne.s32.totalorder %s90, %s91
      %p102 = scmp.eq.s32.totalorder %s14, 0
      %p103 = por %p101, %p102
      %p104 = scmp.ne.s32.totalorder %s90, %s91
      %p105 = scmp.eq.s32.totalorder %s15, 1
      %p106 = por %p104, %p105
      %p108 = scmp.ne.s32.totalorder %s91, %s107
      %p109 = scmp.eq.s32.totalorder %s15, 0
      %p110 = por %p108, %p109
      %p111 = scmp.le.s32.totalorder 1, %s9
      %p112 = scmp.lt.s32.totalorder %s9, 3
      %p113 = pnand %p111, %p112
      %p114 = pneg %p113
      // Predicated region
      $region9: #{magnn_forward.17} parent=5 // pred_check
        _
      $region10: #{magnn_forward.17} parent=5 // pred_check_branch
        %116 = sbr.rel (%p113) target = $region12
      $region11: #{magnn_forward.17} parent=5 // pred_region
        %s117 = ssub.s32 %s9, 1
        // Predicated region
        $region13: #{magnn_forward.17} parent=11 // pred_check
          %p118 = pneg %p56
        $region14: #{magnn_forward.17} parent=11 // pred_check_branch
          %120 = sbr.rel (%p118) target = $region16
        $region15: #{magnn_forward.17} parent=11 // pred_region
          _
        $region16: #{magnn_forward.17} parent=11 // pred_fallthru
          _
        // Predicated region
        $region17: #{magnn_forward.17} parent=11 // pred_check
          %p121 = pneg %p77
        $region18: #{magnn_forward.17} parent=11 // pred_check_branch
          %123 = sbr.rel (%p121) target = $region20
        $region19: #{magnn_forward.17} parent=11 // pred_region
          _
        $region20: #{magnn_forward.17} parent=11 // pred_fallthru
          _
      $region12: #{magnn_forward.17} parent=5 // pred_fallthru
        _
      %p124 = scmp.lt.s32.totalorder %s9, 2
      // Predicated region
      $region21: #{magnn_forward.17} parent=5 // pred_check
        %p125 = pneg %p124
      $region22: #{magnn_forward.17} parent=5 // pred_check_branch
        %127 = sbr.rel (%p125) target = $region24
      $region23: #{magnn_forward.17} parent=5 // pred_region
        // Predicated region
        $region25: #{magnn_forward.17} parent=23 // pred_check
          %p128 = pneg %p29
        $region26: #{magnn_forward.17} parent=23 // pred_check_branch
          %130 = sbr.rel (%p128) target = $region28
        $region27: #{magnn_forward.17} parent=23 // pred_region
          %s131 = sand.u32 %s19, 1
          %s132 = sand.u32 %s19, 1
          %s133 = smul.addr %s132, 32
          %s134 = scalar_lea.vmem [#allocation2], %s133
          %s135 = smul.addr %s9, 8
          %s136 = scalar_lea.vmem %s0, %s135
          // Predicated region
          $region29: #{magnn_forward.17} parent=27 // pred_check
            _
          $region30: #{magnn_forward.17} parent=27 // pred_check_branch
            %138 = sbr.rel (0) target = $region32
          $region31: #{magnn_forward.17} parent=27 // pred_region
            // Predicated region
            $region33: #{magnn_forward.17} parent=31 // pred_check
              _
            $region34: #{magnn_forward.17} parent=31 // pred_check_branch
              %140 = sbr.rel (0) target = $region36
            $region35: #{magnn_forward.17} parent=31 // pred_region
              // Predicated region
              $region48: #{magnn_forward.17} parent=35 // pred_check
                _
              $region49: #{magnn_forward.17} parent=35 // pred_check_branch
                %162 = sbr.rel (0) target = $region51
              $region50: #{magnn_forward.17} parent=35 // pred_region
                loop: start=0, step=1, limit=1
                $region52: #{magnn_forward.17} parent=50 // loop_pre_header
                  _
                $region53: #{magnn_forward.17} parent=50 // loop_header
                  %s164 = sphi 0, %s168
                  %p165 = scmp.ge.s32.totalorder %s164, 1
                  %s169 = sphi %s136, %s136
                  %s170 = sphi %s134, %s134
                $region54: #{magnn_forward.17} parent=50 // loop_header_branch
                  %167 = sbr.rel (%p165) target = $region58
                $region55: #{magnn_forward.17} parent=50 // loop_body
                  %v171 = vld [vmem:[%s169] sm:$0xff]
                  %172 = vst [vmem:[%s170] sm:$0xff] %v171
                  %v173 = vld [vmem:[%s169 + $0x10] sm:$0xff]
                  %174 = vst [vmem:[%s170 + $0x8] sm:$0xff] %v173
                  %v175 = vld [vmem:[%s169 + $0x20] sm:$0xff]
                  %176 = vst [vmem:[%s170 + $0x10] sm:$0xff] %v175
                  %v177 = vld [vmem:[%s169 + $0x30] sm:$0xff]
                  %178 = vst [vmem:[%s170 + $0x18] sm:$0xff] %v177
                $region56: #{magnn_forward.17} parent=50 // loop_footer
                  %s168 = sadd.s32 1, %s164
                $region57: #{magnn_forward.17} parent=50 // loop_footer_branch
                  %163 = sbr.rel target = $region53
                $region58: #{magnn_forward.17} parent=50 // loop_exit
                  _
              $region51: #{magnn_forward.17} parent=35 // pred_fallthru
                _
              // Predicated region
              $region59: #{magnn_forward.17} parent=35 // pred_check
                _
              $region60: #{magnn_forward.17} parent=35 // pred_check_branch
                %180 = sbr.rel target = $region62
              $region61: #{magnn_forward.17} parent=35 // pred_region
                _
              $region62: #{magnn_forward.17} parent=35 // pred_fallthru
                _
            $region36: #{magnn_forward.17} parent=31 // pred_fallthru
              _
            // Predicated region
            $region37: #{magnn_forward.17} parent=31 // pred_check
              _
            $region38: #{magnn_forward.17} parent=31 // pred_check_branch
              %142 = sbr.rel target = $region40
            $region39: #{magnn_forward.17} parent=31 // pred_region
              %s144 = ssub.s32 256, 1
              loop: start=0, step=1, limit=1
              $region41: #{magnn_forward.17} parent=39 // loop_pre_header
                _
              $region42: #{magnn_forward.17} parent=39 // loop_header
                %s146 = sphi 0, %s150
                %p147 = scmp.ge.s32.totalorder %s146, 1
                %s151 = sphi %s136, %s136
                %s152 = sphi %s134, %s134
              $region43: #{magnn_forward.17} parent=39 // loop_header_branch
                %149 = sbr.rel (%p147) target = $region47
              $region44: #{magnn_forward.17} parent=39 // loop_body
                %v153 = vld [vmem:[%s151] sm:%s144]
                %154 = vst [vmem:[%s152] sm:%s144] %v153
                %v155 = vld [vmem:[%s151 + $0x10] sm:%s144]
                %156 = vst [vmem:[%s152 + $0x8] sm:%s144] %v155
                %v157 = vld [vmem:[%s151 + $0x20] sm:%s144]
                %158 = vst [vmem:[%s152 + $0x10] sm:%s144] %v157
                %v159 = vld [vmem:[%s151 + $0x30] sm:%s144]
                %160 = vst [vmem:[%s152 + $0x18] sm:%s144] %v159
              $region45: #{magnn_forward.17} parent=39 // loop_footer
                %s150 = sadd.s32 1, %s146
              $region46: #{magnn_forward.17} parent=39 // loop_footer_branch
                %145 = sbr.rel target = $region42
              $region47: #{magnn_forward.17} parent=39 // loop_exit
                _
            $region40: #{magnn_forward.17} parent=31 // pred_fallthru
              _
          $region32: #{magnn_forward.17} parent=27 // pred_fallthru
            _
          %181 = vnop
        $region28: #{magnn_forward.17} parent=23 // pred_fallthru
          _
      $region24: #{magnn_forward.17} parent=5 // pred_fallthru
        _
      %p182 = scmp.le.s32.totalorder 1, %s9
      %p183 = scmp.lt.s32.totalorder %s9, 3
      %p184 = pnand %p182, %p183
      %p185 = pneg %p184
      // Predicated region
      $region63: #{magnn_forward.17} parent=5 // pred_check
        _
      $region64: #{magnn_forward.17} parent=5 // pred_check_branch
        %187 = sbr.rel (%p184) target = $region66
      $region65: #{magnn_forward.17} parent=5 // pred_region
        %s188 = ssub.s32 %s9, 1
        %s189 = sand.u32 %s22, 1
        %s190 = sand.u32 %s22, 1
        %s191 = smul.addr %s190, 32
        %s192 = scalar_lea.vmem [#allocation2], %s191
        // Predicated region
        $region67: #{magnn_forward.17} parent=65 // pred_check
          %p193 = pneg %p35
        $region68: #{magnn_forward.17} parent=65 // pred_check_branch
          %195 = sbr.rel (%p193) target = $region70
        $region69: #{magnn_forward.17} parent=65 // pred_region
          _
        $region70: #{magnn_forward.17} parent=65 // pred_fallthru
          _
        %s196 = sand.u32 %s22, 1
        %s197 = sand.u32 %s22, 1
        %s198 = smul.addr %s197, 32
        %s199 = scalar_lea.vmem [#allocation2], %s198
        %p200 = pneg %p35
        %p201 = pneg %p32
        %p202 = pneg %p56
        %p203 = pneg %p53
        %p204 = pneg %p77
        %p205 = pneg %p74
        %p206 = pneg %p103
        %p207 = pneg %p100
        %p208 = scmp.lt.s32.totalorder %s14, 1
        %s209 = scalar_select %p208, %s14, 1
        %s210 = smul.addr %s209, 8
        %s211 = scalar_lea.vmem %s3, %s210
        %p212 = scmp.lt.s32.totalorder %s14, 1
        %s213 = scalar_select %p212, %s14, 1
        %s214 = smul.addr %s213, 8
        %s215 = scalar_lea.vmem %s3, %s214
        %v217 = vld [vmem:[%s192] sm:$0xff]
        %v218 = vld [vmem:[%s192 + $0x8] sm:$0xff]
        %v219 = vld [vmem:[%s192 + $0x10] sm:$0xff]
        %v220 = vld [vmem:[%s192 + $0x18] sm:$0xff]
        %vm221 = vcmask 130048
        %v222 = vsel %vm221, %v217, -inf
        %223 = vmax.xlane.f32.xlu0 %v222
        %v224 = vpop.xlane.xlu0 %223
        %v225 = vsel %vm221, %v218, -inf
        %226 = vmax.xlane.f32.xlu0 %v225
        %v227 = vpop.xlane.xlu0 %226
        %v228 = vsel %vm221, %v219, -inf
        %229 = vmax.xlane.f32.xlu0 %v228
        %v230 = vpop.xlane.xlu0 %229
        %v231 = vsel %vm221, %v220, -inf
        %232 = vmax.xlane.f32.xlu0 %v231
        %v233 = vpop.xlane.xlu0 %232
        %v234 = vsub.f32 %v217, %v224
        %v235 = vsub.f32 %v218, %v227
        %v236 = vsub.f32 %v219, %v230
        %v237 = vsub.f32 %v220, %v233
        %v238 = vmul.f32 %v234, 1.442695
        %v239 = vpow.pop %v238
        %v240 = vmul.f32 %v235, 1.442695
        %v241 = vpow.pop %v240
        %v242 = vmul.f32 %v236, 1.442695
        %v243 = vpow.pop %v242
        %v244 = vmul.f32 %v237, 1.442695
        %v245 = vpow.pop %v244
        %v246 = vsel %vm221, %v239, 0.0
        %247 = vadd.xlane.f32.xlu0 %v246
        %v248 = vpop.xlane.xlu0 %247
        %v249 = vsel %vm221, %v241, 0.0
        %250 = vadd.xlane.f32.xlu0 %v249
        %v251 = vpop.xlane.xlu0 %250
        %v252 = vsel %vm221, %v243, 0.0
        %253 = vadd.xlane.f32.xlu0 %v252
        %v254 = vpop.xlane.xlu0 %253
        %v255 = vsel %vm221, %v245, 0.0
        %256 = vadd.xlane.f32.xlu0 %v255
        %v257 = vpop.xlane.xlu0 %256
        %v258 = vrcp.pop %v248
        %v259 = vrcp.pop %v251
        %v260 = vrcp.pop %v254
        %v261 = vrcp.pop %v257
        %v262 = vmul.f32 %v239, %v258
        %v263 = vmul.f32 %v241, %v259
        %v264 = vmul.f32 %v243, %v260
        %v265 = vmul.f32 %v245, %v261
        %v266 = vpack.c.bf16 %v262, %v262
        %v267 = vpack.c.bf16 %v263, %v263
        %v268 = vpack.c.bf16 %v264, %v264
        %v269 = vpack.c.bf16 %v265, %v265
        %v270 = vld [vmem:[%s2] sm:$0x1]
        %v271 = vld [vmem:[%s1] sm:$0xf]
        %v272 = vld [vmem:[%s1 + $0x4] sm:$0xf]
        %v275 = vunpack.c.l.b16 %v271
        %v276 = vunpack.c.l.b16 %v272
        %v277 = vpack.c.b16 %v276, %v275
        %v280 = vsel %vm221, %v266, 0
        %282 = vmatprep.subr.bf16.mxu0 0
        %283 = vmatpush1.bf16.msra.mxu0 0
        %284 = vmatprep.subr.bf16.mxu0 0
        %285 = vmatpush1.bf16.msra.mxu0 0
        %286 = vmatprep.subr.bf16.mxu0 0
        %287 = vmatpush1.bf16.msra.mxu0 0
        %288 = vmatprep.subr.bf16.mxu0 0
        %289 = vmatpush1.bf16.msra.mxu0 0
        %290 = vmatprep.subr.bf16.mxu0 0
        %291 = vmatpush1.bf16.msra.mxu0 0
        %292 = vmatprep.subr.bf16.mxu0 0
        %293 = vmatpush1.bf16.msra.mxu0 0
        %294 = vmatprep.subr.bf16.mxu0 0
        %295 = vmatpush1.bf16.msra.mxu0 0
        %296 = vmatprep.subr.bf16.mxu0 0
        %297 = vmatpush1.bf16.msra.mxu0 %v277
        %298 = vmatprep.subr.bf16.mxu0 0
        %299 = vmatpush2.bf16.msra.mxu0 0
        %300 = vmatprep.subr.bf16.mxu0 0
        %301 = vmatpush2.bf16.msra.mxu0 0
        %302 = vmatprep.subr.bf16.mxu0 0
        %303 = vmatpush2.bf16.msra.mxu0 0
        %304 = vmatprep.subr.bf16.mxu0 0
        %305 = vmatpush2.bf16.msra.mxu0 0
        %306 = vmatprep.subr.bf16.mxu0 0
        %307 = vmatpush2.bf16.msra.mxu0 0
        %308 = vmatprep.subr.bf16.mxu0 0
        %309 = vmatpush2.bf16.msra.mxu0 0
        %310 = vmatprep.subr.bf16.mxu0 0
        %311 = vmatpush2.bf16.msra.mxu0 0
        %312 = vmatprep.subr.bf16.mxu0 0
        %313 = vmatpush2.bf16.msra.mxu0 0
        %314 = vmatprep.mubr.bf16.mxu0 0
        %315 = vmatmul.mubr.bf16.gmra.mxu0 %v280
        %v316 = vpop.f32.mrf.mxu0
        %v317 = vadd.f32 0.0, %v316
        %v318 = vpop.f32.mrf.mxu0
        %v319 = vpop.f32.mrf.mxu0
        %v320 = vpop.f32.mrf.mxu0
        %321 = vdwg.mxu0
        %v323 = vlaneseq
        %v324 = vshrl.u32 %v323, 7
        %v325 = vsub.s32 0, %v324
        %v326 = vrot.slane %v270, %v325
        %v328 = vadd.f32 %v326, %v317
        %s329 = scalar_lea.vmem %s1, 8
        %v330 = vld [vmem:[%s329] sm:$0xf]
        %v331 = vld [vmem:[%s329 + $0x4] sm:$0xf]
        %v334 = vunpack.c.l.b16 %v330
        %v335 = vunpack.c.l.b16 %v331
        %v336 = vpack.c.b16 %v335, %v334
        %v339 = vsel %vm221, %v267, 0
        %341 = vmatprep.subr.bf16.mxu0 0
        %342 = vmatpush1.bf16.msra.mxu0 0
        %343 = vmatprep.subr.bf16.mxu0 0
        %344 = vmatpush1.bf16.msra.mxu0 0
        %345 = vmatprep.subr.bf16.mxu0 0
        %346 = vmatpush1.bf16.msra.mxu0 0
        %347 = vmatprep.subr.bf16.mxu0 0
        %348 = vmatpush1.bf16.msra.mxu0 0
        %349 = vmatprep.subr.bf16.mxu0 0
        %350 = vmatpush1.bf16.msra.mxu0 0
        %351 = vmatprep.subr.bf16.mxu0 0
        %352 = vmatpush1.bf16.msra.mxu0 0
        %353 = vmatprep.subr.bf16.mxu0 0
        %354 = vmatpush1.bf16.msra.mxu0 0
        %355 = vmatprep.subr.bf16.mxu0 0
        %356 = vmatpush1.bf16.msra.mxu0 %v336
        %357 = vmatprep.subr.bf16.mxu0 0
        %358 = vmatpush2.bf16.msra.mxu0 0
        %359 = vmatprep.subr.bf16.mxu0 0
        %360 = vmatpush2.bf16.msra.mxu0 0
        %361 = vmatprep.subr.bf16.mxu0 0
        %362 = vmatpush2.bf16.msra.mxu0 0
        %363 = vmatprep.subr.bf16.mxu0 0
        %364 = vmatpush2.bf16.msra.mxu0 0
        %365 = vmatprep.subr.bf16.mxu0 0
        %366 = vmatpush2.bf16.msra.mxu0 0
        %367 = vmatprep.subr.bf16.mxu0 0
        %368 = vmatpush2.bf16.msra.mxu0 0
        %369 = vmatprep.subr.bf16.mxu0 0
        %370 = vmatpush2.bf16.msra.mxu0 0
        %371 = vmatprep.subr.bf16.mxu0 0
        %372 = vmatpush2.bf16.msra.mxu0 0
        %373 = vmatprep.mubr.bf16.mxu0 0
        %374 = vmatmul.mubr.bf16.gmra.mxu0 %v339
        %v375 = vpop.f32.mrf.mxu0
        %v376 = vadd.f32 0.0, %v375
        %v377 = vpop.f32.mrf.mxu0
        %v378 = vpop.f32.mrf.mxu0
        %v379 = vpop.f32.mrf.mxu0
        %380 = vdwg.mxu0
        %v381 = vadd.f32 %v328, %v376
        %s382 = scalar_lea.vmem %s1, 16
        %v383 = vld [vmem:[%s382] sm:$0xf]
        %v384 = vld [vmem:[%s382 + $0x4] sm:$0xf]
        %v387 = vunpack.c.l.b16 %v383
        %v388 = vunpack.c.l.b16 %v384
        %v389 = vpack.c.b16 %v388, %v387
        %v392 = vsel %vm221, %v268, 0
        %394 = vmatprep.subr.bf16.mxu0 0
        %395 = vmatpush1.bf16.msra.mxu0 0
        %396 = vmatprep.subr.bf16.mxu0 0
        %397 = vmatpush1.bf16.msra.mxu0 0
        %398 = vmatprep.subr.bf16.mxu0 0
        %399 = vmatpush1.bf16.msra.mxu0 0
        %400 = vmatprep.subr.bf16.mxu0 0
        %401 = vmatpush1.bf16.msra.mxu0 0
        %402 = vmatprep.subr.bf16.mxu0 0
        %403 = vmatpush1.bf16.msra.mxu0 0
        %404 = vmatprep.subr.bf16.mxu0 0
        %405 = vmatpush1.bf16.msra.mxu0 0
        %406 = vmatprep.subr.bf16.mxu0 0
        %407 = vmatpush1.bf16.msra.mxu0 0
        %408 = vmatprep.subr.bf16.mxu0 0
        %409 = vmatpush1.bf16.msra.mxu0 %v389
        %410 = vmatprep.subr.bf16.mxu0 0
        %411 = vmatpush2.bf16.msra.mxu0 0
        %412 = vmatprep.subr.bf16.mxu0 0
        %413 = vmatpush2.bf16.msra.mxu0 0
        %414 = vmatprep.subr.bf16.mxu0 0
        %415 = vmatpush2.bf16.msra.mxu0 0
        %416 = vmatprep.subr.bf16.mxu0 0
        %417 = vmatpush2.bf16.msra.mxu0 0
        %418 = vmatprep.subr.bf16.mxu0 0
        %419 = vmatpush2.bf16.msra.mxu0 0
        %420 = vmatprep.subr.bf16.mxu0 0
        %421 = vmatpush2.bf16.msra.mxu0 0
        %422 = vmatprep.subr.bf16.mxu0 0
        %423 = vmatpush2.bf16.msra.mxu0 0
        %424 = vmatprep.subr.bf16.mxu0 0
        %425 = vmatpush2.bf16.msra.mxu0 0
        %426 = vmatprep.mubr.bf16.mxu0 0
        %427 = vmatmul.mubr.bf16.gmra.mxu0 %v392
        %v428 = vpop.f32.mrf.mxu0
        %v429 = vadd.f32 0.0, %v428
        %v430 = vpop.f32.mrf.mxu0
        %v431 = vpop.f32.mrf.mxu0
        %v432 = vpop.f32.mrf.mxu0
        %433 = vdwg.mxu0
        %v434 = vadd.f32 %v381, %v429
        %s435 = scalar_lea.vmem %s1, 24
        %v436 = vld [vmem:[%s435] sm:$0xf]
        %v437 = vld [vmem:[%s435 + $0x4] sm:$0xf]
        %v440 = vunpack.c.l.b16 %v436
        %v441 = vunpack.c.l.b16 %v437
        %v442 = vpack.c.b16 %v441, %v440
        %v445 = vsel %vm221, %v269, 0
        %447 = vmatprep.subr.bf16.mxu0 0
        %448 = vmatpush1.bf16.msra.mxu0 0
        %449 = vmatprep.subr.bf16.mxu0 0
        %450 = vmatpush1.bf16.msra.mxu0 0
        %451 = vmatprep.subr.bf16.mxu0 0
        %452 = vmatpush1.bf16.msra.mxu0 0
        %453 = vmatprep.subr.bf16.mxu0 0
        %454 = vmatpush1.bf16.msra.mxu0 0
        %455 = vmatprep.subr.bf16.mxu0 0
        %456 = vmatpush1.bf16.msra.mxu0 0
        %457 = vmatprep.subr.bf16.mxu0 0
        %458 = vmatpush1.bf16.msra.mxu0 0
        %459 = vmatprep.subr.bf16.mxu0 0
        %460 = vmatpush1.bf16.msra.mxu0 0
        %461 = vmatprep.subr.bf16.mxu0 0
        %462 = vmatpush1.bf16.msra.mxu0 %v442
        %463 = vmatprep.subr.bf16.mxu0 0
        %464 = vmatpush2.bf16.msra.mxu0 0
        %465 = vmatprep.subr.bf16.mxu0 0
        %466 = vmatpush2.bf16.msra.mxu0 0
        %467 = vmatprep.subr.bf16.mxu0 0
        %468 = vmatpush2.bf16.msra.mxu0 0
        %469 = vmatprep.subr.bf16.mxu0 0
        %470 = vmatpush2.bf16.msra.mxu0 0
        %471 = vmatprep.subr.bf16.mxu0 0
        %472 = vmatpush2.bf16.msra.mxu0 0
        %473 = vmatprep.subr.bf16.mxu0 0
        %474 = vmatpush2.bf16.msra.mxu0 0
        %475 = vmatprep.subr.bf16.mxu0 0
        %476 = vmatpush2.bf16.msra.mxu0 0
        %477 = vmatprep.subr.bf16.mxu0 0
        %478 = vmatpush2.bf16.msra.mxu0 0
        %479 = vmatprep.mubr.bf16.mxu0 0
        %480 = vmatmul.mubr.bf16.gmra.mxu0 %v445
        %v481 = vpop.f32.mrf.mxu0
        %v482 = vadd.f32 0.0, %v481
        %v483 = vpop.f32.mrf.mxu0
        %v484 = vpop.f32.mrf.mxu0
        %v485 = vpop.f32.mrf.mxu0
        %486 = vdwg.mxu0
        %v487 = vadd.f32 %v434, %v482
        %v488 = vmax.f32 %v487, 0.0
        %vm489 = vcmask 261120
        %490 = vst.msk [vmem:[%s215] sm:$0xff] %vm489, %v488
        %p491 = scmp.lt.s32.totalorder %s14, 1
        %s492 = scalar_select %p491, %s14, 1
        %s493 = smul.addr %s492, 8
        %s494 = scalar_lea.vmem %s3, %s493
        // Predicated region
        $region71: #{magnn_forward.17} parent=65 // pred_check
          %p495 = pneg %p100
        $region72: #{magnn_forward.17} parent=65 // pred_check_branch
          %497 = sbr.rel (%p495) target = $region74
        $region73: #{magnn_forward.17} parent=65 // pred_region
          _
        $region74: #{magnn_forward.17} parent=65 // pred_fallthru
          _
      $region66: #{magnn_forward.17} parent=5 // pred_fallthru
        _
      %p498 = scmp.le.s32.totalorder 2, %s9
      // Predicated region
      $region75: #{magnn_forward.17} parent=5 // pred_check
        %p499 = pneg %p498
      $region76: #{magnn_forward.17} parent=5 // pred_check_branch
        %501 = sbr.rel (%p499) target = $region78
      $region77: #{magnn_forward.17} parent=5 // pred_region
        %s502 = ssub.s32 %s9, 2
        // Predicated region
        $region79: #{magnn_forward.17} parent=77 // pred_check
          %p503 = pneg %p106
        $region80: #{magnn_forward.17} parent=77 // pred_check_branch
          %505 = sbr.rel (%p503) target = $region82
        $region81: #{magnn_forward.17} parent=77 // pred_region
          %p506 = scmp.lt.s32.totalorder %s15, 1
          %s507 = scalar_select %p506, %s15, 1
          %s508 = smul.addr %s507, 8
          %s509 = scalar_lea.vmem %s3, %s508
        $region82: #{magnn_forward.17} parent=77 // pred_fallthru
          _
      $region78: #{magnn_forward.17} parent=5 // pred_fallthru
        _
    $region6: #{magnn_forward.17} parent=1 // loop_footer
      %s13 = sadd.s32 1, %s9
    $region7: #{magnn_forward.17} parent=1 // loop_footer_branch
      %8 = sbr.rel target = $region3
    $region8: #{magnn_forward.17} parent=1 // loop_exit
      _

// kernel: magnn_forward.24
$region0: #{magnn_forward.24}
  #allocation0 [shape = 'u32[]', space=smem, size = 0x4, offset = 0x4, fixed_abs, tag = 'smem constant byte address 0x4 - core index']
  #allocation1 [shape = 'u32[144,128]{1,0:T(1,128)}', space=vmem, size = 0x12000, scoped, tag = 'internal scratch']
  #allocation2 [shape = 'f32[1,1]{1,0:T(1,128)S(1)}', space=vmem, size = 0x200, scoped, tag = 'scoped memory for magnn_forward.24']
  %s0 = inlined_call_operand.vmem [shape: f32[16,32], index: 0, kind: input, shape index: {}]
  %s1 = inlined_call_operand.vmem [shape: f32[32,16], index: 1, kind: input, shape index: {}]
  %s2 = inlined_call_operand.vmem [shape: f32[1,16], index: 2, kind: input, shape index: {}]
  %s3 = inlined_call_operand.vmem [shape: f32[16,1], index: 3, kind: input, shape index: {}]
  %s4 = inlined_call_operand.<no memory space> [shape: f32[1,1], index: 4, kind: input, shape index: {}]
  %s5 = inlined_call_operand.vmem [shape: f32[16,1], index: 5, kind: output, shape index: {}]
  %s6 = sld [smem:[#allocation0]]
  $region30: #{magnn_forward.24} parent=0
    _
  %s8 = ssub.s32 1, %s6
  %s9 = scalar_select 0, %s8, %s6
  %v10 = vstv %s4
  %11 = vst [vmem:[#allocation2] sm:$0x1] %v10
  // Predicated region
  $region2: #{magnn_forward.24} parent=0 // pred_check
    _
  $region3: #{magnn_forward.24} parent=0 // pred_check_branch
    %13 = sbr.rel (0) target = $region5
  $region4: #{magnn_forward.24} parent=0 // pred_region
    _
  $region5: #{magnn_forward.24} parent=0 // pred_fallthru
    _
  // Predicated region
  $region6: #{magnn_forward.24} parent=0 // pred_check
    _
  $region7: #{magnn_forward.24} parent=0 // pred_check_branch
    %15 = sbr.rel (0) target = $region9
  $region8: #{magnn_forward.24} parent=0 // pred_region
    _
  $region9: #{magnn_forward.24} parent=0 // pred_fallthru
    _
  // Predicated region
  $region10: #{magnn_forward.24} parent=0 // pred_check
    _
  $region11: #{magnn_forward.24} parent=0 // pred_check_branch
    %17 = sbr.rel (0) target = $region13
  $region12: #{magnn_forward.24} parent=0 // pred_region
    _
  $region13: #{magnn_forward.24} parent=0 // pred_fallthru
    _
  // Predicated region
  $region14: #{magnn_forward.24} parent=0 // pred_check
    _
  $region15: #{magnn_forward.24} parent=0 // pred_check_branch
    %19 = sbr.rel (0) target = $region17
  $region16: #{magnn_forward.24} parent=0 // pred_region
    _
  $region17: #{magnn_forward.24} parent=0 // pred_fallthru
    _
  // Predicated region
  $region18: #{magnn_forward.24} parent=0 // pred_check
    _
  $region19: #{magnn_forward.24} parent=0 // pred_check_branch
    %21 = sbr.rel (0) target = $region21
  $region20: #{magnn_forward.24} parent=0 // pred_region
    _
  $region21: #{magnn_forward.24} parent=0 // pred_fallthru
    _
  %v22 = vld [vmem:[%s0] sm:$0xff]
  %v23 = vld [vmem:[%s0 + $0x8] sm:$0xff]
  %v24 = vld [vmem:[%s1] sm:$0xff]
  %v25 = vld [vmem:[%s1 + $0x8] sm:$0xff]
  %v26 = vld [vmem:[%s1 + $0x10] sm:$0xff]
  %v27 = vld [vmem:[%s1 + $0x18] sm:$0xff]
  %v28 = vld [vmem:[%s2] sm:$0x1]
  %v30 = vlaneseq
  %v31 = vshrl.u32 %v30, 7
  %v32 = vsub.s32 0, %v31
  %v33 = vrot.slane %v28, %v32
  %vm35 = vcmask 261120
  %v37 = vsel %vm35, %v22, 0
  %v40 = vsel %vm35, %v23, 0
  %42 = vmatprep.subr.mxu0 0.0
  %43 = vmatpush1.msra.mxu0 0.0
  %44 = vmatprep.subr.mxu0 0.0
  %45 = vmatpush1.msra.mxu0 0.0
  %46 = vmatprep.subr.mxu0 0.0
  %47 = vmatpush1.msra.mxu0 0.0
  %48 = vmatprep.subr.mxu0 0.0
  %49 = vmatpush1.msra.mxu0 0.0
  %50 = vmatprep.subr.mxu0 0.0
  %51 = vmatpush1.msra.mxu0 0.0
  %52 = vmatprep.subr.mxu0 0.0
  %53 = vmatpush1.msra.mxu0 0.0
  %54 = vmatprep.subr.mxu0 0.0
  %55 = vmatpush1.msra.mxu0 0.0
  %56 = vmatprep.subr.mxu0 0.0
  %57 = vmatpush1.msra.mxu0 0.0
  %58 = vmatprep.subr.mxu0 0.0
  %59 = vmatpush1.msra.mxu0 0.0
  %60 = vmatprep.subr.mxu0 0.0
  %61 = vmatpush1.msra.mxu0 0.0
  %62 = vmatprep.subr.mxu0 0.0
  %63 = vmatpush1.msra.mxu0 0.0
  %64 = vmatprep.subr.mxu0 0.0
  %65 = vmatpush1.msra.mxu0 0.0
  %66 = vmatprep.subr.mxu0 0.0
  %67 = vmatpush1.msra.mxu0 %v27
  %68 = vmatprep.subr.mxu0 0.0
  %69 = vmatpush1.msra.mxu0 %v26
  %70 = vmatprep.subr.mxu0 0.0
  %71 = vmatpush1.msra.mxu0 %v25
  %72 = vmatprep.subr.mxu0 0.0
  %73 = vmatpush1.msra.mxu0 %v24
  %74 = vmatprep.subr.mxu0 0.0
  %75 = vmatpush2.msra.mxu0 0.0
  %76 = vmatprep.subr.mxu0 0.0
  %77 = vmatpush2.msra.mxu0 0.0
  %78 = vmatprep.subr.mxu0 0.0
  %79 = vmatpush2.msra.mxu0 0.0
  %80 = vmatprep.subr.mxu0 0.0
  %81 = vmatpush2.msra.mxu0 0.0
  %82 = vmatprep.subr.mxu0 0.0
  %83 = vmatpush2.msra.mxu0 0.0
  %84 = vmatprep.subr.mxu0 0.0
  %85 = vmatpush2.msra.mxu0 0.0
  %86 = vmatprep.subr.mxu0 0.0
  %87 = vmatpush2.msra.mxu0 0.0
  %88 = vmatprep.subr.mxu0 0.0
  %89 = vmatpush2.msra.mxu0 0.0
  %90 = vmatprep.subr.mxu0 0.0
  %91 = vmatpush2.msra.mxu0 0.0
  %92 = vmatprep.subr.mxu0 0.0
  %93 = vmatpush2.msra.mxu0 0.0
  %94 = vmatprep.subr.mxu0 0.0
  %95 = vmatpush2.msra.mxu0 0.0
  %96 = vmatprep.subr.mxu0 0.0
  %97 = vmatpush2.msra.mxu0 0.0
  %98 = vmatprep.subr.mxu0 0.0
  %99 = vmatpush2.msra.mxu0 0.0
  %100 = vmatprep.subr.mxu0 0.0
  %101 = vmatpush2.msra.mxu0 0.0
  %102 = vmatprep.subr.mxu0 0.0
  %103 = vmatpush2.msra.mxu0 0.0
  %104 = vmatprep.subr.mxu0 0.0
  %105 = vmatpush2.msra.mxu0 0.0
  %106 = vmatprep.mubr.f32.mxu0 0.0
  %107 = vmatmul.mubr.f32.gmra.mxu0 %v37
  %v108 = vpop.f32.mrf.mxu0
  %v109 = vadd.f32 %v33, %v108
  %v110 = vpop.f32.mrf.mxu0
  %111 = vmatprep.mubr.f32.mxu0 0.0
  %112 = vmatmul.mubr.f32.gmra.mxu0 %v40
  %v113 = vpop.f32.mrf.mxu0
  %v114 = vadd.f32 %v33, %v113
  %v115 = vpop.f32.mrf.mxu0
  %116 = vdwg.mxu0
  %v117 = vmax.f32 %v109, 0.0
  %v118 = vmax.f32 %v114, 0.0
  %v119 = vld [vmem:[%s3] sm:$0xff]
  %v120 = vld [vmem:[%s3 + $0x8] sm:$0xff]
  %v121 = vld [vmem:[#allocation2] sm:$0x1]
  %v123 = vlaneseq
  %v124 = vshrl.u32 %v123, 7
  %v125 = vsub.s32 0, %v124
  %v126 = vrot.slane %v121, %v125
  %vm128 = vcmask 130048
  %v130 = vsel %vm128, %v117, 0
  %v133 = vsel %vm128, %v118, 0
  %135 = vmatprep.subr.mxu0 0.0
  %136 = vmatpush1.msra.mxu0 0.0
  %137 = vmatprep.subr.mxu0 0.0
  %138 = vmatpush1.msra.mxu0 0.0
  %139 = vmatprep.subr.mxu0 0.0
  %140 = vmatpush1.msra.mxu0 0.0
  %141 = vmatprep.subr.mxu0 0.0
  %142 = vmatpush1.msra.mxu0 0.0
  %143 = vmatprep.subr.mxu0 0.0
  %144 = vmatpush1.msra.mxu0 0.0
  %145 = vmatprep.subr.mxu0 0.0
  %146 = vmatpush1.msra.mxu0 0.0
  %147 = vmatprep.subr.mxu0 0.0
  %148 = vmatpush1.msra.mxu0 0.0
  %149 = vmatprep.subr.mxu0 0.0
  %150 = vmatpush1.msra.mxu0 0.0
  %151 = vmatprep.subr.mxu0 0.0
  %152 = vmatpush1.msra.mxu0 0.0
  %153 = vmatprep.subr.mxu0 0.0
  %154 = vmatpush1.msra.mxu0 0.0
  %155 = vmatprep.subr.mxu0 0.0
  %156 = vmatpush1.msra.mxu0 0.0
  %157 = vmatprep.subr.mxu0 0.0
  %158 = vmatpush1.msra.mxu0 0.0
  %159 = vmatprep.subr.mxu0 0.0
  %160 = vmatpush1.msra.mxu0 0.0
  %161 = vmatprep.subr.mxu0 0.0
  %162 = vmatpush1.msra.mxu0 0.0
  %163 = vmatprep.subr.mxu0 0.0
  %164 = vmatpush1.msra.mxu0 %v120
  %165 = vmatprep.subr.mxu0 0.0
  %166 = vmatpush1.msra.mxu0 %v119
  %167 = vmatprep.subr.mxu0 0.0
  %168 = vmatpush2.msra.mxu0 0.0
  %169 = vmatprep.subr.mxu0 0.0
  %170 = vmatpush2.msra.mxu0 0.0
  %171 = vmatprep.subr.mxu0 0.0
  %172 = vmatpush2.msra.mxu0 0.0
  %173 = vmatprep.subr.mxu0 0.0
  %174 = vmatpush2.msra.mxu0 0.0
  %175 = vmatprep.subr.mxu0 0.0
  %176 = vmatpush2.msra.mxu0 0.0
  %177 = vmatprep.subr.mxu0 0.0
  %178 = vmatpush2.msra.mxu0 0.0
  %179 = vmatprep.subr.mxu0 0.0
  %180 = vmatpush2.msra.mxu0 0.0
  %181 = vmatprep.subr.mxu0 0.0
  %182 = vmatpush2.msra.mxu0 0.0
  %183 = vmatprep.subr.mxu0 0.0
  %184 = vmatpush2.msra.mxu0 0.0
  %185 = vmatprep.subr.mxu0 0.0
  %186 = vmatpush2.msra.mxu0 0.0
  %187 = vmatprep.subr.mxu0 0.0
  %188 = vmatpush2.msra.mxu0 0.0
  %189 = vmatprep.subr.mxu0 0.0
  %190 = vmatpush2.msra.mxu0 0.0
  %191 = vmatprep.subr.mxu0 0.0
  %192 = vmatpush2.msra.mxu0 0.0
  %193 = vmatprep.subr.mxu0 0.0
  %194 = vmatpush2.msra.mxu0 0.0
  %195 = vmatprep.subr.mxu0 0.0
  %196 = vmatpush2.msra.mxu0 0.0
  %197 = vmatprep.subr.mxu0 0.0
  %198 = vmatpush2.msra.mxu0 0.0
  %199 = vmatprep.mubr.f32.mxu0 0.0
  %200 = vmatmul.mubr.f32.gmra.mxu0 %v130
  %v201 = vpop.f32.mrf.mxu0
  %v202 = vadd.f32 %v126, %v201
  %v203 = vpop.f32.mrf.mxu0
  %204 = vmatprep.mubr.f32.mxu0 0.0
  %205 = vmatmul.mubr.f32.gmra.mxu0 %v133
  %v206 = vpop.f32.mrf.mxu0
  %v207 = vadd.f32 %v126, %v206
  %v208 = vpop.f32.mrf.mxu0
  %209 = vdwg.mxu0
  %v210 = vsub.f32 0.0, %v202
  %v211 = vsub.f32 0.0, %v207
  %v212 = vmul.f32 %v210, 1.442695
  %v213 = vpow.pop %v212
  %v214 = vmul.f32 %v211, 1.442695
  %v215 = vpow.pop %v214
  %v216 = vadd.f32 %v213, 1.0
  %v217 = vadd.f32 %v215, 1.0
  %v218 = vrcp.pop %v216
  %v219 = vmul.f32 1.0, %v218
  %v220 = vrcp.pop %v217
  %v221 = vmul.f32 1.0, %v220
  %vm222 = vcmask 7168
  %223 = vst.msk [vmem:[%s5] sm:$0xff] %vm222, %v219
  %224 = vst.msk [vmem:[%s5 + $0x8] sm:$0xff] %vm222, %v221
  // Predicated region
  $region22: #{magnn_forward.24} parent=0 // pred_check
    _
  $region23: #{magnn_forward.24} parent=0 // pred_check_branch
    %226 = sbr.rel (0) target = $region25
  $region24: #{magnn_forward.24} parent=0 // pred_region
    _
  $region25: #{magnn_forward.24} parent=0 // pred_fallthru
    _
  // Predicated region
  $region26: #{magnn_forward.24} parent=0 // pred_check
    _
  $region27: #{magnn_forward.24} parent=0 // pred_check_branch
    %228 = sbr.rel (0) target = $region29
  $region28: #{magnn_forward.24} parent=0 // pred_region
    _
  $region29: #{magnn_forward.24} parent=0 // pred_fallthru
    _

</llo_original>
